<compile_context>
chip_gen: v5e
topology: v5e:2x2
jax: 0.10.0
libtpu: 0.0.40
codegen_flags: <defaults>
</compile_context>

<pallas_src>
import numpy as np
from numpy.polynomial.legendre import Legendre

import jax
import jax.numpy as jnp
from jax.experimental import pallas as pl
from jax.experimental.pallas import tpu as pltpu


# -----------------------------------------------------------------------------
# Parameter setup — identical math to FCLegendre.compute_extension_matrix
# -----------------------------------------------------------------------------
def compute_extension_matrix(n: int, d: int) -> np.ndarray:
    a = 0.0
    h = 0.1
    total_points = 2 * n + d
    full_grid = a + h * np.arange(total_points, dtype=np.float64)
    fit_grid = np.concatenate((full_grid[0:n], full_grid[-n:]), 0)
    extension_grid = full_grid[n:-n]

    I = np.eye(2 * n, dtype=np.float64)
    polynomials = [
        Legendre(I[j, :], domain=[full_grid[0], full_grid[-1]]) for j in range(2 * n)
    ]

    X = np.zeros((2 * n, 2 * n), dtype=np.float64)
    Q = np.zeros((d, 2 * n), dtype=np.float64)
    for j in range(2 * n):
        Q[:, j] = polynomials[j](extension_grid)
        X[:, j] = polynomials[j](fit_grid)

    return np.matmul(Q, np.linalg.pinv(X, rcond=1e-31))  # (d, 2n) float64


# -----------------------------------------------------------------------------
# Pallas kernel: one block of TC channels per grid step, channels-last layout.
#   x block:  (H,   W,   TC)
#   out block:(H+d, W+d, TC)
# -----------------------------------------------------------------------------
def _make_fc_kernel(ext_mat_np: np.ndarray, n: int, d: int, H: int, W: int):
    # Coefficients baked in as Python float scalars -> folded at trace time.
    em = [[float(ext_mat_np[j, k]) for k in range(2 * n)] for j in range(d)]

    def fc_kernel(x_ref, o_ref):
        x = x_ref[...]  # (H, W, TC), f32

        # ---- interior: direct store, no concatenates ----
        o_ref[:H, :W, :] = x

        # ---- extend left/right (one_sided): new columns W .. W+d-1 ----
        # ext[..., j] = sum_k em[j, k] * y[..., k],  y = cat(x[..., -n:], x[..., :n])
        for j in range(d):
            acc = em[j][0] * x[:, W - n:W - n + 1, :]                    # (H, 1, TC)
            for k in range(1, n):
                acc = acc + em[j][k] * x[:, W - n + k:W - n + k + 1, :]
            for k in range(n):
                acc = acc + em[j][n + k] * x[:, k:k + 1, :]
            o_ref[:H, W + j:W + j + 1, :] = acc

        # ---- extend top/bottom (one_sided): new rows H .. H+d-1, full width ----
        # Boundary rows of the left/right-extended field are read back from o_ref.
        bot = o_ref[H - n:H, :, :]    # (n, W+d, TC)  == x1[..., -n:, :]
        top = o_ref[0:n, :, :]        # (n, W+d, TC)  == x1[..., :n, :]
        for i in range(d):
            acc = em[i][0] * bot[0:1, :, :]                              # (1, W+d, TC)
            for k in range(1, n):
                acc = acc + em[i][k] * bot[k:k + 1, :, :]
            for k in range(n):
                acc = acc + em[i][n + k] * top[k:k + 1, :, :]
            o_ref[H + i:H + i + 1, :, :] = acc

    return fc_kernel


def _pick_channel_block(bc: int, h: int, w: int, d: int) -> int:
    """Channels per grid step: keep (in + out) block a few MiB so the
    double-buffered pair stays under scoped-VMEM defaults on v5e/v6e/v7x,
    while keeping the trailing (lane) dim as wide as possible."""
    bytes_per_channel = 4 * (h * w + (h + d) * (w + d))
    budget = 8 << 20                          # ~8 MiB per (in+out) block
    cap = max(1, budget // bytes_per_channel)
    if bc <= cap or bc % 128 != 0:
        return bc                              # full channel axis in one block
    tc = 128
    while tc * 2 <= cap and bc % (tc * 2) == 0:
        tc *= 2
    return tc


def fc_legendre_forward(x: jax.Array, ext_mat_np: np.ndarray, n: int, d: int) -> jax.Array:
    """Equivalent of FCLegendre.forward(x, dim=2, one_sided=True).

    x: float32 [B, C, H, W]  ->  float32 [B, C, H+d, W+d]
    """
    B, C, H, W = x.shape
    BC = B * C
    Hd, Wd = H + d, W + d

    # Channels-last layout for the kernel (lane-dense trailing dim = B*C).
    x_cl = jnp.transpose(x.reshape(BC, H, W), (1, 2, 0)).astype(jnp.float32)  # (H, W, BC)

    TC = _pick_channel_block(BC, H, W, d)
    grid = (BC // TC,)

    kernel = _make_fc_kernel(ext_mat_np, n, d, H, W)

    out_cl = pl.pallas_call(
        kernel,
        out_shape=jax.ShapeDtypeStruct((Hd, Wd, BC), jnp.float32),
        grid_spec=pltpu.PrefetchScalarGridSpec(
            num_scalar_prefetch=0,
            grid=grid,
            in_specs=[pl.BlockSpec((H, W, TC), lambda i: (0, 0, i))],
            out_specs=pl.BlockSpec((Hd, Wd, TC), lambda i: (0, 0, i)),
        ),
        compiler_params=pltpu.CompilerParams(
            dimension_semantics=("parallel",),
        ),
    )(x_cl)

    # Back to NCHW (layout plumbing in the wrapper, outside the kernel).
    return jnp.transpose(out_cl, (2, 0, 1)).reshape(B, C, Hd, Wd)


# -----------------------------------------------------------------------------
# Pure-JAX reference (for correctness check only)
# -----------------------------------------------------------------------------
def _reference(x, ext_mat, n, d):
    hp = jax.lax.Precision.HIGHEST
    ext_mat = ext_mat.astype(jnp.float32)
    # left/right
    y = jnp.concatenate([x[..., -n:], x[..., :n]], axis=-1)
    ext = jnp.matmul(y, ext_mat.T, precision=hp)
    x = jnp.concatenate([x, ext], axis=-1)
    # top/bottom
    y = jnp.concatenate([x[..., -n:, :], x[..., :n, :]], axis=-2)
    ext = jnp.matmul(ext_mat, y, precision=hp)
    x = jnp.concatenate([x, ext], axis=-2)
    return x


if __name__ == "__main__":
    # FCLegendre(n=3, d=4)
    n, d = 3, 4
    ext_mat_np = compute_extension_matrix(n, d).astype(np.float32)  # (d, 2n)

    # Small deterministic input: B=2, C=4, H=16, W=16 (NCHW)
    key = jax.random.PRNGKey(0)
    x = jax.random.normal(key, (2, 4, 16, 16), dtype=jnp.float32)

    out = fc_legendre_forward(x, ext_mat_np, n, d)
    out = jax.block_until_ready(out)

    ref = _reference(x, jnp.asarray(ext_mat_np), n, d)
    assert out.shape == (2, 4, 16 + d, 16 + d), out.shape
    np.testing.assert_allclose(np.asarray(out), np.asarray(ref), rtol=1e-5, atol=1e-4)

    print("KERNEL_OK")
</pallas_src>

<mosaic_0001>
module attributes {stable_mosaic.version = 11 : i64} {
  func.func @fc_kernel(%arg0: i32, %arg1: memref<16x16x8xf32, #tpu.memory_space<vmem>>, %arg2: memref<20x20x8xf32, #tpu.memory_space<vmem>>) attributes {dimension_semantics = [#tpu.dimension_semantics<parallel>], iteration_bounds = array<i64: 1>, scalar_prefetch = 0 : i64, scratch_operands = 0 : i64, tpu.core_type = #tpu.core_type<tc>, window_params = [{transform_indices = @transform_0, window_bounds = array<i64: 16, 16, 8>}, {transform_indices = @transform_1, window_bounds = array<i64: 20, 20, 8>}]} {
    %c0 = arith.constant 0 : index
    %c0_0 = arith.constant 0 : index
    %c0_1 = arith.constant 0 : index
    %0 = vector.load %arg1[%c0, %c0_0, %c0_1] : memref<16x16x8xf32, #tpu.memory_space<vmem>>, vector<16x16x8xf32>
    %c0_2 = arith.constant 0 : index
    %c0_3 = arith.constant 0 : index
    %c0_4 = arith.constant 0 : index
    %1 = vector.load %arg2[%c0_2, %c0_3, %c0_4] : memref<20x20x8xf32, #tpu.memory_space<vmem>>, vector<16x16x8xf32>
    tpu.vector_store %arg2[%c0_2, %c0_3, %c0_4], %0 {strides = array<i32>} : memref<20x20x8xf32, #tpu.memory_space<vmem>>, vector<16x16x8xf32>,
    %2 = vector.extract_strided_slice %0 {offsets = [0, 13, 0], sizes = [16, 1, 8], strides = [1, 1, 1]} : vector<16x16x8xf32> to vector<16x1x8xf32>
    %cst = arith.constant 0.238095239 : f32
    %3 = vector.broadcast %cst : f32 to vector<16x1x8xf32>
    %4 = arith.mulf %3, %2 : vector<16x1x8xf32>
    %5 = vector.extract_strided_slice %0 {offsets = [0, 14, 0], sizes = [16, 1, 8], strides = [1, 1, 1]} : vector<16x16x8xf32> to vector<16x1x8xf32>
    %cst_5 = arith.constant -1.07142854 : f32
    %6 = vector.broadcast %cst_5 : f32 to vector<16x1x8xf32>
    %7 = arith.mulf %6, %5 : vector<16x1x8xf32>
    %8 = arith.addf %4, %7 : vector<16x1x8xf32>
    %9 = vector.extract_strided_slice %0 {offsets = [0, 15, 0], sizes = [16, 1, 8], strides = [1, 1, 1]} : vector<16x16x8xf32> to vector<16x1x8xf32>
    %cst_6 = arith.constant 1.71428573 : f32
    %10 = vector.broadcast %cst_6 : f32 to vector<16x1x8xf32>
    %11 = arith.mulf %10, %9 : vector<16x1x8xf32>
    %12 = arith.addf %8, %11 : vector<16x1x8xf32>
    %13 = vector.extract_strided_slice %0 {offsets = [0, 0, 0], sizes = [16, 1, 8], strides = [1, 1, 1]} : vector<16x16x8xf32> to vector<16x1x8xf32>
    %cst_7 = arith.constant 0.428571433 : f32
    %14 = vector.broadcast %cst_7 : f32 to vector<16x1x8xf32>
    %15 = arith.mulf %14, %13 : vector<16x1x8xf32>
    %16 = arith.addf %12, %15 : vector<16x1x8xf32>
    %17 = vector.extract_strided_slice %0 {offsets = [0, 1, 0], sizes = [16, 1, 8], strides = [1, 1, 1]} : vector<16x16x8xf32> to vector<16x1x8xf32>
    %cst_8 = arith.constant -0.428571433 : f32
    %18 = vector.broadcast %cst_8 : f32 to vector<16x1x8xf32>
    %19 = arith.mulf %18, %17 : vector<16x1x8xf32>
    %20 = arith.addf %16, %19 : vector<16x1x8xf32>
    %21 = vector.extract_strided_slice %0 {offsets = [0, 2, 0], sizes = [16, 1, 8], strides = [1, 1, 1]} : vector<16x16x8xf32> to vector<16x1x8xf32>
    %cst_9 = arith.constant 0.119047619 : f32
    %22 = vector.broadcast %cst_9 : f32 to vector<16x1x8xf32>
    %23 = arith.mulf %22, %21 : vector<16x1x8xf32>
    %24 = arith.addf %20, %23 : vector<16x1x8xf32>
    %c0_10 = arith.constant 0 : index
    %c16 = arith.constant 16 : index
    %c0_11 = arith.constant 0 : index
    %25 = vector.load %arg2[%c0_10, %c16, %c0_11] : memref<20x20x8xf32, #tpu.memory_space<vmem>>, vector<16x1x8xf32>
    tpu.vector_store %arg2[%c0_10, %c16, %c0_11], %24 {strides = array<i32>} : memref<20x20x8xf32, #tpu.memory_space<vmem>>, vector<16x1x8xf32>,
    %26 = vector.extract_strided_slice %0 {offsets = [0, 13, 0], sizes = [16, 1, 8], strides = [1, 1, 1]} : vector<16x16x8xf32> to vector<16x1x8xf32>
    %cst_12 = arith.constant 0.357142866 : f32
    %27 = vector.broadcast %cst_12 : f32 to vector<16x1x8xf32>
    %28 = arith.mulf %27, %26 : vector<16x1x8xf32>
    %29 = vector.extract_strided_slice %0 {offsets = [0, 14, 0], sizes = [16, 1, 8], strides = [1, 1, 1]} : vector<16x16x8xf32> to vector<16x1x8xf32>
    %cst_13 = arith.constant -1.42857146 : f32
    %30 = vector.broadcast %cst_13 : f32 to vector<16x1x8xf32>
    %31 = arith.mulf %30, %29 : vector<16x1x8xf32>
    %32 = arith.addf %28, %31 : vector<16x1x8xf32>
    %33 = vector.extract_strided_slice %0 {offsets = [0, 15, 0], sizes = [16, 1, 8], strides = [1, 1, 1]} : vector<16x16x8xf32> to vector<16x1x8xf32>
    %cst_14 = arith.constant 1.71428573 : f32
    %34 = vector.broadcast %cst_14 : f32 to vector<16x1x8xf32>
    %35 = arith.mulf %34, %33 : vector<16x1x8xf32>
    %36 = arith.addf %32, %35 : vector<16x1x8xf32>
    %37 = vector.extract_strided_slice %0 {offsets = [0, 0, 0], sizes = [16, 1, 8], strides = [1, 1, 1]} : vector<16x16x8xf32> to vector<16x1x8xf32>
    %cst_15 = arith.constant 1.14285719 : f32
    %38 = vector.broadcast %cst_15 : f32 to vector<16x1x8xf32>
    %39 = arith.mulf %38, %37 : vector<16x1x8xf32>
    %40 = arith.addf %36, %39 : vector<16x1x8xf32>
    %41 = vector.extract_strided_slice %0 {offsets = [0, 1, 0], sizes = [16, 1, 8], strides = [1, 1, 1]} : vector<16x16x8xf32> to vector<16x1x8xf32>
    %cst_16 = arith.constant -1.07142854 : f32
    %42 = vector.broadcast %cst_16 : f32 to vector<16x1x8xf32>
    %43 = arith.mulf %42, %41 : vector<16x1x8xf32>
    %44 = arith.addf %40, %43 : vector<16x1x8xf32>
    %45 = vector.extract_strided_slice %0 {offsets = [0, 2, 0], sizes = [16, 1, 8], strides = [1, 1, 1]} : vector<16x16x8xf32> to vector<16x1x8xf32>
    %cst_17 = arith.constant 0.285714298 : f32
    %46 = vector.broadcast %cst_17 : f32 to vector<16x1x8xf32>
    %47 = arith.mulf %46, %45 : vector<16x1x8xf32>
    %48 = arith.addf %44, %47 : vector<16x1x8xf32>
    %c0_18 = arith.constant 0 : index
    %c17 = arith.constant 17 : index
    %c0_19 = arith.constant 0 : index
    %49 = vector.load %arg2[%c0_18, %c17, %c0_19] : memref<20x20x8xf32, #tpu.memory_space<vmem>>, vector<16x1x8xf32>
    tpu.vector_store %arg2[%c0_18, %c17, %c0_19], %48 {strides = array<i32>} : memref<20x20x8xf32, #tpu.memory_space<vmem>>, vector<16x1x8xf32>,
    %50 = vector.extract_strided_slice %0 {offsets = [0, 13, 0], sizes = [16, 1, 8], strides = [1, 1, 1]} : vector<16x16x8xf32> to vector<16x1x8xf32>
    %cst_20 = arith.constant 0.285714298 : f32
    %51 = vector.broadcast %cst_20 : f32 to vector<16x1x8xf32>
    %52 = arith.mulf %51, %50 : vector<16x1x8xf32>
    %53 = vector.extract_strided_slice %0 {offsets = [0, 14, 0], sizes = [16, 1, 8], strides = [1, 1, 1]} : vector<16x16x8xf32> to vector<16x1x8xf32>
    %cst_21 = arith.constant -1.07142854 : f32
    %54 = vector.broadcast %cst_21 : f32 to vector<16x1x8xf32>
    %55 = arith.mulf %54, %53 : vector<16x1x8xf32>
    %56 = arith.addf %52, %55 : vector<16x1x8xf32>
    %57 = vector.extract_strided_slice %0 {offsets = [0, 15, 0], sizes = [16, 1, 8], strides = [1, 1, 1]} : vector<16x16x8xf32> to vector<16x1x8xf32>
    %cst_22 = arith.constant 1.14285719 : f32
    %58 = vector.broadcast %cst_22 : f32 to vector<16x1x8xf32>
    %59 = arith.mulf %58, %57 : vector<16x1x8xf32>
    %60 = arith.addf %56, %59 : vector<16x1x8xf32>
    %61 = vector.extract_strided_slice %0 {offsets = [0, 0, 0], sizes = [16, 1, 8], strides = [1, 1, 1]} : vector<16x16x8xf32> to vector<16x1x8xf32>
    %cst_23 = arith.constant 1.71428573 : f32
    %62 = vector.broadcast %cst_23 : f32 to vector<16x1x8xf32>
    %63 = arith.mulf %62, %61 : vector<16x1x8xf32>
    %64 = arith.addf %60, %63 : vector<16x1x8xf32>
    %65 = vector.extract_strided_slice %0 {offsets = [0, 1, 0], sizes = [16, 1, 8], strides = [1, 1, 1]} : vector<16x16x8xf32> to vector<16x1x8xf32>
    %cst_24 = arith.constant -1.42857146 : f32
    %66 = vector.broadcast %cst_24 : f32 to vector<16x1x8xf32>
    %67 = arith.mulf %66, %65 : vector<16x1x8xf32>
    %68 = arith.addf %64, %67 : vector<16x1x8xf32>
    %69 = vector.extract_strided_slice %0 {offsets = [0, 2, 0], sizes = [16, 1, 8], strides = [1, 1, 1]} : vector<16x16x8xf32> to vector<16x1x8xf32>
    %cst_25 = arith.constant 0.357142866 : f32
    %70 = vector.broadcast %cst_25 : f32 to vector<16x1x8xf32>
    %71 = arith.mulf %70, %69 : vector<16x1x8xf32>
    %72 = arith.addf %68, %71 : vector<16x1x8xf32>
    %c0_26 = arith.constant 0 : index
    %c18 = arith.constant 18 : index
    %c0_27 = arith.constant 0 : index
    %73 = vector.load %arg2[%c0_26, %c18, %c0_27] : memref<20x20x8xf32, #tpu.memory_space<vmem>>, vector<16x1x8xf32>
    tpu.vector_store %arg2[%c0_26, %c18, %c0_27], %72 {strides = array<i32>} : memref<20x20x8xf32, #tpu.memory_space<vmem>>, vector<16x1x8xf32>,
    %74 = vector.extract_strided_slice %0 {offsets = [0, 13, 0], sizes = [16, 1, 8], strides = [1, 1, 1]} : vector<16x16x8xf32> to vector<16x1x8xf32>
    %cst_28 = arith.constant 0.119047619 : f32
    %75 = vector.broadcast %cst_28 : f32 to vector<16x1x8xf32>
    %76 = arith.mulf %75, %74 : vector<16x1x8xf32>
    %77 = vector.extract_strided_slice %0 {offsets = [0, 14, 0], sizes = [16, 1, 8], strides = [1, 1, 1]} : vector<16x16x8xf32> to vector<16x1x8xf32>
    %cst_29 = arith.constant -0.428571433 : f32
    %78 = vector.broadcast %cst_29 : f32 to vector<16x1x8xf32>
    %79 = arith.mulf %78, %77 : vector<16x1x8xf32>
    %80 = arith.addf %76, %79 : vector<16x1x8xf32>
    %81 = vector.extract_strided_slice %0 {offsets = [0, 15, 0], sizes = [16, 1, 8], strides = [1, 1, 1]} : vector<16x16x8xf32> to vector<16x1x8xf32>
    %cst_30 = arith.constant 0.428571433 : f32
    %82 = vector.broadcast %cst_30 : f32 to vector<16x1x8xf32>
    %83 = arith.mulf %82, %81 : vector<16x1x8xf32>
    %84 = arith.addf %80, %83 : vector<16x1x8xf32>
    %85 = vector.extract_strided_slice %0 {offsets = [0, 0, 0], sizes = [16, 1, 8], strides = [1, 1, 1]} : vector<16x16x8xf32> to vector<16x1x8xf32>
    %cst_31 = arith.constant 1.71428573 : f32
    %86 = vector.broadcast %cst_31 : f32 to vector<16x1x8xf32>
    %87 = arith.mulf %86, %85 : vector<16x1x8xf32>
    %88 = arith.addf %84, %87 : vector<16x1x8xf32>
    %89 = vector.extract_strided_slice %0 {offsets = [0, 1, 0], sizes = [16, 1, 8], strides = [1, 1, 1]} : vector<16x16x8xf32> to vector<16x1x8xf32>
    %cst_32 = arith.constant -1.07142854 : f32
    %90 = vector.broadcast %cst_32 : f32 to vector<16x1x8xf32>
    %91 = arith.mulf %90, %89 : vector<16x1x8xf32>
    %92 = arith.addf %88, %91 : vector<16x1x8xf32>
    %93 = vector.extract_strided_slice %0 {offsets = [0, 2, 0], sizes = [16, 1, 8], strides = [1, 1, 1]} : vector<16x16x8xf32> to vector<16x1x8xf32>
    %cst_33 = arith.constant 0.238095239 : f32
    %94 = vector.broadcast %cst_33 : f32 to vector<16x1x8xf32>
    %95 = arith.mulf %94, %93 : vector<16x1x8xf32>
    %96 = arith.addf %92, %95 : vector<16x1x8xf32>
    %c0_34 = arith.constant 0 : index
    %c19 = arith.constant 19 : index
    %c0_35 = arith.constant 0 : index
    %97 = vector.load %arg2[%c0_34, %c19, %c0_35] : memref<20x20x8xf32, #tpu.memory_space<vmem>>, vector<16x1x8xf32>
    tpu.vector_store %arg2[%c0_34, %c19, %c0_35], %96 {strides = array<i32>} : memref<20x20x8xf32, #tpu.memory_space<vmem>>, vector<16x1x8xf32>,
    %c13 = arith.constant 13 : index
    %c0_36 = arith.constant 0 : index
    %c0_37 = arith.constant 0 : index
    %98 = vector.load %arg2[%c13, %c0_36, %c0_37] : memref<20x20x8xf32, #tpu.memory_space<vmem>>, vector<3x20x8xf32>
    %c0_38 = arith.constant 0 : index
    %c0_39 = arith.constant 0 : index
    %c0_40 = arith.constant 0 : index
    %99 = vector.load %arg2[%c0_38, %c0_39, %c0_40] : memref<20x20x8xf32, #tpu.memory_space<vmem>>, vector<3x20x8xf32>
    %100 = vector.extract_strided_slice %98 {offsets = [0, 0, 0], sizes = [1, 20, 8], strides = [1, 1, 1]} : vector<3x20x8xf32> to vector<1x20x8xf32>
    %cst_41 = arith.constant 0.238095239 : f32
    %101 = vector.broadcast %cst_41 : f32 to vector<1x20x8xf32>
    %102 = arith.mulf %101, %100 : vector<1x20x8xf32>
    %103 = vector.extract_strided_slice %98 {offsets = [1, 0, 0], sizes = [1, 20, 8], strides = [1, 1, 1]} : vector<3x20x8xf32> to vector<1x20x8xf32>
    %cst_42 = arith.constant -1.07142854 : f32
    %104 = vector.broadcast %cst_42 : f32 to vector<1x20x8xf32>
    %105 = arith.mulf %104, %103 : vector<1x20x8xf32>
    %106 = arith.addf %102, %105 : vector<1x20x8xf32>
    %107 = vector.extract_strided_slice %98 {offsets = [2, 0, 0], sizes = [1, 20, 8], strides = [1, 1, 1]} : vector<3x20x8xf32> to vector<1x20x8xf32>
    %cst_43 = arith.constant 1.71428573 : f32
    %108 = vector.broadcast %cst_43 : f32 to vector<1x20x8xf32>
    %109 = arith.mulf %108, %107 : vector<1x20x8xf32>
    %110 = arith.addf %106, %109 : vector<1x20x8xf32>
    %111 = vector.extract_strided_slice %99 {offsets = [0, 0, 0], sizes = [1, 20, 8], strides = [1, 1, 1]} : vector<3x20x8xf32> to vector<1x20x8xf32>
    %cst_44 = arith.constant 0.428571433 : f32
    %112 = vector.broadcast %cst_44 : f32 to vector<1x20x8xf32>
    %113 = arith.mulf %112, %111 : vector<1x20x8xf32>
    %114 = arith.addf %110, %113 : vector<1x20x8xf32>
    %115 = vector.extract_strided_slice %99 {offsets = [1, 0, 0], sizes = [1, 20, 8], strides = [1, 1, 1]} : vector<3x20x8xf32> to vector<1x20x8xf32>
    %cst_45 = arith.constant -0.428571433 : f32
    %116 = vector.broadcast %cst_45 : f32 to vector<1x20x8xf32>
    %117 = arith.mulf %116, %115 : vector<1x20x8xf32>
    %118 = arith.addf %114, %117 : vector<1x20x8xf32>
    %119 = vector.extract_strided_slice %99 {offsets = [2, 0, 0], sizes = [1, 20, 8], strides = [1, 1, 1]} : vector<3x20x8xf32> to vector<1x20x8xf32>
    %cst_46 = arith.constant 0.119047619 : f32
    %120 = vector.broadcast %cst_46 : f32 to vector<1x20x8xf32>
    %121 = arith.mulf %120, %119 : vector<1x20x8xf32>
    %122 = arith.addf %118, %121 : vector<1x20x8xf32>
    %c16_47 = arith.constant 16 : index
    %c0_48 = arith.constant 0 : index
    %c0_49 = arith.constant 0 : index
    %123 = vector.load %arg2[%c16_47, %c0_48, %c0_49] : memref<20x20x8xf32, #tpu.memory_space<vmem>>, vector<1x20x8xf32>
    tpu.vector_store %arg2[%c16_47, %c0_48, %c0_49], %122 {strides = array<i32>} : memref<20x20x8xf32, #tpu.memory_space<vmem>>, vector<1x20x8xf32>,
    %124 = vector.extract_strided_slice %98 {offsets = [0, 0, 0], sizes = [1, 20, 8], strides = [1, 1, 1]} : vector<3x20x8xf32> to vector<1x20x8xf32>
    %cst_50 = arith.constant 0.357142866 : f32
    %125 = vector.broadcast %cst_50 : f32 to vector<1x20x8xf32>
    %126 = arith.mulf %125, %124 : vector<1x20x8xf32>
    %127 = vector.extract_strided_slice %98 {offsets = [1, 0, 0], sizes = [1, 20, 8], strides = [1, 1, 1]} : vector<3x20x8xf32> to vector<1x20x8xf32>
    %cst_51 = arith.constant -1.42857146 : f32
    %128 = vector.broadcast %cst_51 : f32 to vector<1x20x8xf32>
    %129 = arith.mulf %128, %127 : vector<1x20x8xf32>
    %130 = arith.addf %126, %129 : vector<1x20x8xf32>
    %131 = vector.extract_strided_slice %98 {offsets = [2, 0, 0], sizes = [1, 20, 8], strides = [1, 1, 1]} : vector<3x20x8xf32> to vector<1x20x8xf32>
    %cst_52 = arith.constant 1.71428573 : f32
    %132 = vector.broadcast %cst_52 : f32 to vector<1x20x8xf32>
    %133 = arith.mulf %132, %131 : vector<1x20x8xf32>
    %134 = arith.addf %130, %133 : vector<1x20x8xf32>
    %135 = vector.extract_strided_slice %99 {offsets = [0, 0, 0], sizes = [1, 20, 8], strides = [1, 1, 1]} : vector<3x20x8xf32> to vector<1x20x8xf32>
    %cst_53 = arith.constant 1.14285719 : f32
    %136 = vector.broadcast %cst_53 : f32 to vector<1x20x8xf32>
    %137 = arith.mulf %136, %135 : vector<1x20x8xf32>
    %138 = arith.addf %134, %137 : vector<1x20x8xf32>
    %139 = vector.extract_strided_slice %99 {offsets = [1, 0, 0], sizes = [1, 20, 8], strides = [1, 1, 1]} : vector<3x20x8xf32> to vector<1x20x8xf32>
    %cst_54 = arith.constant -1.07142854 : f32
    %140 = vector.broadcast %cst_54 : f32 to vector<1x20x8xf32>
    %141 = arith.mulf %140, %139 : vector<1x20x8xf32>
    %142 = arith.addf %138, %141 : vector<1x20x8xf32>
    %143 = vector.extract_strided_slice %99 {offsets = [2, 0, 0], sizes = [1, 20, 8], strides = [1, 1, 1]} : vector<3x20x8xf32> to vector<1x20x8xf32>
    %cst_55 = arith.constant 0.285714298 : f32
    %144 = vector.broadcast %cst_55 : f32 to vector<1x20x8xf32>
    %145 = arith.mulf %144, %143 : vector<1x20x8xf32>
    %146 = arith.addf %142, %145 : vector<1x20x8xf32>
    %c17_56 = arith.constant 17 : index
    %c0_57 = arith.constant 0 : index
    %c0_58 = arith.constant 0 : index
    %147 = vector.load %arg2[%c17_56, %c0_57, %c0_58] : memref<20x20x8xf32, #tpu.memory_space<vmem>>, vector<1x20x8xf32>
    tpu.vector_store %arg2[%c17_56, %c0_57, %c0_58], %146 {strides = array<i32>} : memref<20x20x8xf32, #tpu.memory_space<vmem>>, vector<1x20x8xf32>,
    %148 = vector.extract_strided_slice %98 {offsets = [0, 0, 0], sizes = [1, 20, 8], strides = [1, 1, 1]} : vector<3x20x8xf32> to vector<1x20x8xf32>
    %cst_59 = arith.constant 0.285714298 : f32
    %149 = vector.broadcast %cst_59 : f32 to vector<1x20x8xf32>
    %150 = arith.mulf %149, %148 : vector<1x20x8xf32>
    %151 = vector.extract_strided_slice %98 {offsets = [1, 0, 0], sizes = [1, 20, 8], strides = [1, 1, 1]} : vector<3x20x8xf32> to vector<1x20x8xf32>
    %cst_60 = arith.constant -1.07142854 : f32
    %152 = vector.broadcast %cst_60 : f32 to vector<1x20x8xf32>
    %153 = arith.mulf %152, %151 : vector<1x20x8xf32>
    %154 = arith.addf %150, %153 : vector<1x20x8xf32>
    %155 = vector.extract_strided_slice %98 {offsets = [2, 0, 0], sizes = [1, 20, 8], strides = [1, 1, 1]} : vector<3x20x8xf32> to vector<1x20x8xf32>
    %cst_61 = arith.constant 1.14285719 : f32
    %156 = vector.broadcast %cst_61 : f32 to vector<1x20x8xf32>
    %157 = arith.mulf %156, %155 : vector<1x20x8xf32>
    %158 = arith.addf %154, %157 : vector<1x20x8xf32>
    %159 = vector.extract_strided_slice %99 {offsets = [0, 0, 0], sizes = [1, 20, 8], strides = [1, 1, 1]} : vector<3x20x8xf32> to vector<1x20x8xf32>
    %cst_62 = arith.constant 1.71428573 : f32
    %160 = vector.broadcast %cst_62 : f32 to vector<1x20x8xf32>
    %161 = arith.mulf %160, %159 : vector<1x20x8xf32>
    %162 = arith.addf %158, %161 : vector<1x20x8xf32>
    %163 = vector.extract_strided_slice %99 {offsets = [1, 0, 0], sizes = [1, 20, 8], strides = [1, 1, 1]} : vector<3x20x8xf32> to vector<1x20x8xf32>
    %cst_63 = arith.constant -1.42857146 : f32
    %164 = vector.broadcast %cst_63 : f32 to vector<1x20x8xf32>
    %165 = arith.mulf %164, %163 : vector<1x20x8xf32>
    %166 = arith.addf %162, %165 : vector<1x20x8xf32>
    %167 = vector.extract_strided_slice %99 {offsets = [2, 0, 0], sizes = [1, 20, 8], strides = [1, 1, 1]} : vector<3x20x8xf32> to vector<1x20x8xf32>
    %cst_64 = arith.constant 0.357142866 : f32
    %168 = vector.broadcast %cst_64 : f32 to vector<1x20x8xf32>
    %169 = arith.mulf %168, %167 : vector<1x20x8xf32>
    %170 = arith.addf %166, %169 : vector<1x20x8xf32>
    %c18_65 = arith.constant 18 : index
    %c0_66 = arith.constant 0 : index
    %c0_67 = arith.constant 0 : index
    %171 = vector.load %arg2[%c18_65, %c0_66, %c0_67] : memref<20x20x8xf32, #tpu.memory_space<vmem>>, vector<1x20x8xf32>
    tpu.vector_store %arg2[%c18_65, %c0_66, %c0_67], %170 {strides = array<i32>} : memref<20x20x8xf32, #tpu.memory_space<vmem>>, vector<1x20x8xf32>,
    %172 = vector.extract_strided_slice %98 {offsets = [0, 0, 0], sizes = [1, 20, 8], strides = [1, 1, 1]} : vector<3x20x8xf32> to vector<1x20x8xf32>
    %cst_68 = arith.constant 0.119047619 : f32
    %173 = vector.broadcast %cst_68 : f32 to vector<1x20x8xf32>
    %174 = arith.mulf %173, %172 : vector<1x20x8xf32>
    %175 = vector.extract_strided_slice %98 {offsets = [1, 0, 0], sizes = [1, 20, 8], strides = [1, 1, 1]} : vector<3x20x8xf32> to vector<1x20x8xf32>
    %cst_69 = arith.constant -0.428571433 : f32
    %176 = vector.broadcast %cst_69 : f32 to vector<1x20x8xf32>
    %177 = arith.mulf %176, %175 : vector<1x20x8xf32>
    %178 = arith.addf %174, %177 : vector<1x20x8xf32>
    %179 = vector.extract_strided_slice %98 {offsets = [2, 0, 0], sizes = [1, 20, 8], strides = [1, 1, 1]} : vector<3x20x8xf32> to vector<1x20x8xf32>
    %cst_70 = arith.constant 0.428571433 : f32
    %180 = vector.broadcast %cst_70 : f32 to vector<1x20x8xf32>
    %181 = arith.mulf %180, %179 : vector<1x20x8xf32>
    %182 = arith.addf %178, %181 : vector<1x20x8xf32>
    %183 = vector.extract_strided_slice %99 {offsets = [0, 0, 0], sizes = [1, 20, 8], strides = [1, 1, 1]} : vector<3x20x8xf32> to vector<1x20x8xf32>
    %cst_71 = arith.constant 1.71428573 : f32
    %184 = vector.broadcast %cst_71 : f32 to vector<1x20x8xf32>
    %185 = arith.mulf %184, %183 : vector<1x20x8xf32>
    %186 = arith.addf %182, %185 : vector<1x20x8xf32>
    %187 = vector.extract_strided_slice %99 {offsets = [1, 0, 0], sizes = [1, 20, 8], strides = [1, 1, 1]} : vector<3x20x8xf32> to vector<1x20x8xf32>
    %cst_72 = arith.constant -1.07142854 : f32
    %188 = vector.broadcast %cst_72 : f32 to vector<1x20x8xf32>
    %189 = arith.mulf %188, %187 : vector<1x20x8xf32>
    %190 = arith.addf %186, %189 : vector<1x20x8xf32>
    %191 = vector.extract_strided_slice %99 {offsets = [2, 0, 0], sizes = [1, 20, 8], strides = [1, 1, 1]} : vector<3x20x8xf32> to vector<1x20x8xf32>
    %cst_73 = arith.constant 0.238095239 : f32
    %192 = vector.broadcast %cst_73 : f32 to vector<1x20x8xf32>
    %193 = arith.mulf %192, %191 : vector<1x20x8xf32>
    %194 = arith.addf %190, %193 : vector<1x20x8xf32>
    %c19_74 = arith.constant 19 : index
    %c0_75 = arith.constant 0 : index
    %c0_76 = arith.constant 0 : index
    %195 = vector.load %arg2[%c19_74, %c0_75, %c0_76] : memref<20x20x8xf32, #tpu.memory_space<vmem>>, vector<1x20x8xf32>
    tpu.vector_store %arg2[%c19_74, %c0_75, %c0_76], %194 {strides = array<i32>} : memref<20x20x8xf32, #tpu.memory_space<vmem>>, vector<1x20x8xf32>,
    return
  }
  func.func @transform_0(%arg0: i32) -> (i32, i32, i32) {
    %c0_i32 = arith.constant 0 : i32
    %c0_i32_0 = arith.constant 0 : i32
    %c0_i32_1 = arith.constant 0 : i32
    return %c0_i32, %c0_i32_0, %arg0 : i32, i32, i32
  }
  func.func @transform_1(%arg0: i32) -> (i32, i32, i32) {
    %c0_i32 = arith.constant 0 : i32
    %c0_i32_0 = arith.constant 0 : i32
    %c0_i32_1 = arith.constant 0 : i32
    return %c0_i32, %c0_i32_0, %arg0 : i32, i32, i32
  }
}

</mosaic_0001>

<llo_original>
// kernel: tpu_custom_call.1
$region0: #{tpu_custom_call.1}
  #allocation0 [shape = 'u32[]', space=smem, size = 0x4, offset = 0x4, fixed_abs, tag = 'smem constant byte address 0x4 - core index']
  #allocation1 [shape = 'u32[72,128]{1,0:T(1,128)}', space=vmem, size = 0x9000, scoped, tag = 'internal scratch']
  %s0 = inlined_call_operand.vmem [shape: f32[16,16,8], index: 0, kind: input, shape index: {}]
  %s1 = inlined_call_operand.vmem [shape: f32[20,20,8], index: 1, kind: output, shape index: {}]
  %s2 = sld [smem:[#allocation0]]
  $region14: #{tpu_custom_call.1} parent=0
    _
  %s4 = ssub.s32 1, %s2
  %s5 = scalar_select 0, %s4, %s2
  // Predicated region
  $region2: #{tpu_custom_call.1} parent=0 // pred_check
    _
  $region3: #{tpu_custom_call.1} parent=0 // pred_check_branch
    %7 = sbr.rel (0) target = $region5
  $region4: #{tpu_custom_call.1} parent=0 // pred_region
    _
  $region5: #{tpu_custom_call.1} parent=0 // pred_fallthru
    _
  %v8 = vld [vmem:[%s0] sm:$0xff]
  %v9 = vld [vmem:[%s0 + $0x8] sm:$0xff]
  %v10 = vld [vmem:[%s0 + $0x10] sm:$0xff]
  %v11 = vld [vmem:[%s0 + $0x18] sm:$0xff]
  %v12 = vld [vmem:[%s0 + $0x20] sm:$0xff]
  %v13 = vld [vmem:[%s0 + $0x28] sm:$0xff]
  %v14 = vld [vmem:[%s0 + $0x30] sm:$0xff]
  %v15 = vld [vmem:[%s0 + $0x38] sm:$0xff]
  %v16 = vld [vmem:[%s0 + $0x40] sm:$0xff]
  %v17 = vld [vmem:[%s0 + $0x48] sm:$0xff]
  %v18 = vld [vmem:[%s0 + $0x50] sm:$0xff]
  %v19 = vld [vmem:[%s0 + $0x58] sm:$0xff]
  %v20 = vld [vmem:[%s0 + $0x60] sm:$0xff]
  %v21 = vld [vmem:[%s0 + $0x68] sm:$0xff]
  %v22 = vld [vmem:[%s0 + $0x70] sm:$0xff]
  %v23 = vld [vmem:[%s0 + $0x78] sm:$0xff]
  %v24 = vld [vmem:[%s0 + $0x80] sm:$0xff]
  %v25 = vld [vmem:[%s0 + $0x88] sm:$0xff]
  %v26 = vld [vmem:[%s0 + $0x90] sm:$0xff]
  %v27 = vld [vmem:[%s0 + $0x98] sm:$0xff]
  %v28 = vld [vmem:[%s0 + $0xa0] sm:$0xff]
  %v29 = vld [vmem:[%s0 + $0xa8] sm:$0xff]
  %v30 = vld [vmem:[%s0 + $0xb0] sm:$0xff]
  %v31 = vld [vmem:[%s0 + $0xb8] sm:$0xff]
  %v32 = vld [vmem:[%s0 + $0xc0] sm:$0xff]
  %v33 = vld [vmem:[%s0 + $0xc8] sm:$0xff]
  %v34 = vld [vmem:[%s0 + $0xd0] sm:$0xff]
  %v35 = vld [vmem:[%s0 + $0xd8] sm:$0xff]
  %v36 = vld [vmem:[%s0 + $0xe0] sm:$0xff]
  %v37 = vld [vmem:[%s0 + $0xe8] sm:$0xff]
  %v38 = vld [vmem:[%s0 + $0xf0] sm:$0xff]
  %v39 = vld [vmem:[%s0 + $0xf8] sm:$0xff]
  %vm40 = vcmask 64512
  %41 = vst.msk [vmem:[%s1] sm:$0xff] %vm40, %v8
  %42 = vst.msk [vmem:[%s1 + $0x8] sm:$0xff] %vm40, %v9
  %43 = vst.msk [vmem:[%s1 + $0x18] sm:$0xff] %vm40, %v10
  %44 = vst.msk [vmem:[%s1 + $0x20] sm:$0xff] %vm40, %v11
  %45 = vst.msk [vmem:[%s1 + $0x30] sm:$0xff] %vm40, %v12
  %46 = vst.msk [vmem:[%s1 + $0x38] sm:$0xff] %vm40, %v13
  %47 = vst.msk [vmem:[%s1 + $0x48] sm:$0xff] %vm40, %v14
  %48 = vst.msk [vmem:[%s1 + $0x50] sm:$0xff] %vm40, %v15
  %49 = vst.msk [vmem:[%s1 + $0x60] sm:$0xff] %vm40, %v16
  %50 = vst.msk [vmem:[%s1 + $0x68] sm:$0xff] %vm40, %v17
  %51 = vst.msk [vmem:[%s1 + $0x78] sm:$0xff] %vm40, %v18
  %52 = vst.msk [vmem:[%s1 + $0x80] sm:$0xff] %vm40, %v19
  %53 = vst.msk [vmem:[%s1 + $0x90] sm:$0xff] %vm40, %v20
  %54 = vst.msk [vmem:[%s1 + $0x98] sm:$0xff] %vm40, %v21
  %55 = vst.msk [vmem:[%s1 + $0xa8] sm:$0xff] %vm40, %v22
  %56 = vst.msk [vmem:[%s1 + $0xb0] sm:$0xff] %vm40, %v23
  %57 = vst.msk [vmem:[%s1 + $0xc0] sm:$0xff] %vm40, %v24
  %58 = vst.msk [vmem:[%s1 + $0xc8] sm:$0xff] %vm40, %v25
  %59 = vst.msk [vmem:[%s1 + $0xd8] sm:$0xff] %vm40, %v26
  %60 = vst.msk [vmem:[%s1 + $0xe0] sm:$0xff] %vm40, %v27
  %61 = vst.msk [vmem:[%s1 + $0xf0] sm:$0xff] %vm40, %v28
  %62 = vst.msk [vmem:[%s1 + $0xf8] sm:$0xff] %vm40, %v29
  %63 = vst.msk [vmem:[%s1 + $0x108] sm:$0xff] %vm40, %v30
  %64 = vst.msk [vmem:[%s1 + $0x110] sm:$0xff] %vm40, %v31
  %65 = vst.msk [vmem:[%s1 + $0x120] sm:$0xff] %vm40, %v32
  %66 = vst.msk [vmem:[%s1 + $0x128] sm:$0xff] %vm40, %v33
  %67 = vst.msk [vmem:[%s1 + $0x138] sm:$0xff] %vm40, %v34
  %68 = vst.msk [vmem:[%s1 + $0x140] sm:$0xff] %vm40, %v35
  %69 = vst.msk [vmem:[%s1 + $0x150] sm:$0xff] %vm40, %v36
  %70 = vst.msk [vmem:[%s1 + $0x158] sm:$0xff] %vm40, %v37
  %71 = vst.msk [vmem:[%s1 + $0x168] sm:$0xff] %vm40, %v38
  %72 = vst.msk [vmem:[%s1 + $0x170] sm:$0xff] %vm40, %v39
  %v73 = vmul.f32 %v9, 0.23809524
  %v74 = vmul.f32 %v11, 0.23809524
  %v75 = vmul.f32 %v13, 0.23809524
  %v76 = vmul.f32 %v15, 0.23809524
  %v77 = vmul.f32 %v17, 0.23809524
  %v78 = vmul.f32 %v19, 0.23809524
  %v79 = vmul.f32 %v21, 0.23809524
  %v80 = vmul.f32 %v23, 0.23809524
  %v81 = vmul.f32 %v25, 0.23809524
  %v82 = vmul.f32 %v27, 0.23809524
  %v83 = vmul.f32 %v29, 0.23809524
  %v84 = vmul.f32 %v31, 0.23809524
  %v85 = vmul.f32 %v33, 0.23809524
  %v86 = vmul.f32 %v35, 0.23809524
  %v87 = vmul.f32 %v37, 0.23809524
  %v88 = vmul.f32 %v39, 0.23809524
  %v89 = vmul.f32 %v9, -1.0714285
  %v90 = vmul.f32 %v11, -1.0714285
  %v91 = vmul.f32 %v13, -1.0714285
  %v92 = vmul.f32 %v15, -1.0714285
  %v93 = vmul.f32 %v17, -1.0714285
  %v94 = vmul.f32 %v19, -1.0714285
  %v95 = vmul.f32 %v21, -1.0714285
  %v96 = vmul.f32 %v23, -1.0714285
  %v97 = vmul.f32 %v25, -1.0714285
  %v98 = vmul.f32 %v27, -1.0714285
  %v99 = vmul.f32 %v29, -1.0714285
  %v100 = vmul.f32 %v31, -1.0714285
  %v101 = vmul.f32 %v33, -1.0714285
  %v102 = vmul.f32 %v35, -1.0714285
  %v103 = vmul.f32 %v37, -1.0714285
  %v104 = vmul.f32 %v39, -1.0714285
  %v121 = vrot.slane %v89, 1
  %v122 = vrot.slane %v90, 1
  %v123 = vrot.slane %v91, 1
  %v124 = vrot.slane %v92, 1
  %v125 = vrot.slane %v93, 1
  %v126 = vrot.slane %v94, 1
  %v127 = vrot.slane %v95, 1
  %v128 = vrot.slane %v96, 1
  %v129 = vrot.slane %v97, 1
  %v130 = vrot.slane %v98, 1
  %v131 = vrot.slane %v99, 1
  %v132 = vrot.slane %v100, 1
  %v133 = vrot.slane %v101, 1
  %v134 = vrot.slane %v102, 1
  %v135 = vrot.slane %v103, 1
  %v136 = vrot.slane %v104, 1
  %v153 = vadd.f32 %v73, %v121
  %v154 = vadd.f32 %v74, %v122
  %v155 = vadd.f32 %v75, %v123
  %v156 = vadd.f32 %v76, %v124
  %v157 = vadd.f32 %v77, %v125
  %v158 = vadd.f32 %v78, %v126
  %v159 = vadd.f32 %v79, %v127
  %v160 = vadd.f32 %v80, %v128
  %v161 = vadd.f32 %v81, %v129
  %v162 = vadd.f32 %v82, %v130
  %v163 = vadd.f32 %v83, %v131
  %v164 = vadd.f32 %v84, %v132
  %v165 = vadd.f32 %v85, %v133
  %v166 = vadd.f32 %v86, %v134
  %v167 = vadd.f32 %v87, %v135
  %v168 = vadd.f32 %v88, %v136
  %v169 = vmul.f32 %v9, 1.7142857
  %v170 = vmul.f32 %v11, 1.7142857
  %v171 = vmul.f32 %v13, 1.7142857
  %v172 = vmul.f32 %v15, 1.7142857
  %v173 = vmul.f32 %v17, 1.7142857
  %v174 = vmul.f32 %v19, 1.7142857
  %v175 = vmul.f32 %v21, 1.7142857
  %v176 = vmul.f32 %v23, 1.7142857
  %v177 = vmul.f32 %v25, 1.7142857
  %v178 = vmul.f32 %v27, 1.7142857
  %v179 = vmul.f32 %v29, 1.7142857
  %v180 = vmul.f32 %v31, 1.7142857
  %v181 = vmul.f32 %v33, 1.7142857
  %v182 = vmul.f32 %v35, 1.7142857
  %v183 = vmul.f32 %v37, 1.7142857
  %v184 = vmul.f32 %v39, 1.7142857
  %v201 = vrot.slane %v169, 2
  %v202 = vrot.slane %v170, 2
  %v203 = vrot.slane %v171, 2
  %v204 = vrot.slane %v172, 2
  %v205 = vrot.slane %v173, 2
  %v206 = vrot.slane %v174, 2
  %v207 = vrot.slane %v175, 2
  %v208 = vrot.slane %v176, 2
  %v209 = vrot.slane %v177, 2
  %v210 = vrot.slane %v178, 2
  %v211 = vrot.slane %v179, 2
  %v212 = vrot.slane %v180, 2
  %v213 = vrot.slane %v181, 2
  %v214 = vrot.slane %v182, 2
  %v215 = vrot.slane %v183, 2
  %v216 = vrot.slane %v184, 2
  %v233 = vadd.f32 %v153, %v201
  %v234 = vadd.f32 %v154, %v202
  %v235 = vadd.f32 %v155, %v203
  %v236 = vadd.f32 %v156, %v204
  %v237 = vadd.f32 %v157, %v205
  %v238 = vadd.f32 %v158, %v206
  %v239 = vadd.f32 %v159, %v207
  %v240 = vadd.f32 %v160, %v208
  %v241 = vadd.f32 %v161, %v209
  %v242 = vadd.f32 %v162, %v210
  %v243 = vadd.f32 %v163, %v211
  %v244 = vadd.f32 %v164, %v212
  %v245 = vadd.f32 %v165, %v213
  %v246 = vadd.f32 %v166, %v214
  %v247 = vadd.f32 %v167, %v215
  %v248 = vadd.f32 %v168, %v216
  %v249 = vmul.f32 %v8, 0.42857143
  %v250 = vmul.f32 %v10, 0.42857143
  %v251 = vmul.f32 %v12, 0.42857143
  %v252 = vmul.f32 %v14, 0.42857143
  %v253 = vmul.f32 %v16, 0.42857143
  %v254 = vmul.f32 %v18, 0.42857143
  %v255 = vmul.f32 %v20, 0.42857143
  %v256 = vmul.f32 %v22, 0.42857143
  %v257 = vmul.f32 %v24, 0.42857143
  %v258 = vmul.f32 %v26, 0.42857143
  %v259 = vmul.f32 %v28, 0.42857143
  %v260 = vmul.f32 %v30, 0.42857143
  %v261 = vmul.f32 %v32, 0.42857143
  %v262 = vmul.f32 %v34, 0.42857143
  %v263 = vmul.f32 %v36, 0.42857143
  %v264 = vmul.f32 %v38, 0.42857143
  %v281 = vrot.slane %v249, 3
  %v282 = vrot.slane %v250, 3
  %v283 = vrot.slane %v251, 3
  %v284 = vrot.slane %v252, 3
  %v285 = vrot.slane %v253, 3
  %v286 = vrot.slane %v254, 3
  %v287 = vrot.slane %v255, 3
  %v288 = vrot.slane %v256, 3
  %v289 = vrot.slane %v257, 3
  %v290 = vrot.slane %v258, 3
  %v291 = vrot.slane %v259, 3
  %v292 = vrot.slane %v260, 3
  %v293 = vrot.slane %v261, 3
  %v294 = vrot.slane %v262, 3
  %v295 = vrot.slane %v263, 3
  %v296 = vrot.slane %v264, 3
  %v313 = vadd.f32 %v233, %v281
  %v314 = vadd.f32 %v234, %v282
  %v315 = vadd.f32 %v235, %v283
  %v316 = vadd.f32 %v236, %v284
  %v317 = vadd.f32 %v237, %v285
  %v318 = vadd.f32 %v238, %v286
  %v319 = vadd.f32 %v239, %v287
  %v320 = vadd.f32 %v240, %v288
  %v321 = vadd.f32 %v241, %v289
  %v322 = vadd.f32 %v242, %v290
  %v323 = vadd.f32 %v243, %v291
  %v324 = vadd.f32 %v244, %v292
  %v325 = vadd.f32 %v245, %v293
  %v326 = vadd.f32 %v246, %v294
  %v327 = vadd.f32 %v247, %v295
  %v328 = vadd.f32 %v248, %v296
  %v329 = vmul.f32 %v8, -0.42857143
  %v330 = vmul.f32 %v10, -0.42857143
  %v331 = vmul.f32 %v12, -0.42857143
  %v332 = vmul.f32 %v14, -0.42857143
  %v333 = vmul.f32 %v16, -0.42857143
  %v334 = vmul.f32 %v18, -0.42857143
  %v335 = vmul.f32 %v20, -0.42857143
  %v336 = vmul.f32 %v22, -0.42857143
  %v337 = vmul.f32 %v24, -0.42857143
  %v338 = vmul.f32 %v26, -0.42857143
  %v339 = vmul.f32 %v28, -0.42857143
  %v340 = vmul.f32 %v30, -0.42857143
  %v341 = vmul.f32 %v32, -0.42857143
  %v342 = vmul.f32 %v34, -0.42857143
  %v343 = vmul.f32 %v36, -0.42857143
  %v344 = vmul.f32 %v38, -0.42857143
  %v361 = vrot.slane %v329, 4
  %v362 = vrot.slane %v330, 4
  %v363 = vrot.slane %v331, 4
  %v364 = vrot.slane %v332, 4
  %v365 = vrot.slane %v333, 4
  %v366 = vrot.slane %v334, 4
  %v367 = vrot.slane %v335, 4
  %v368 = vrot.slane %v336, 4
  %v369 = vrot.slane %v337, 4
  %v370 = vrot.slane %v338, 4
  %v371 = vrot.slane %v339, 4
  %v372 = vrot.slane %v340, 4
  %v373 = vrot.slane %v341, 4
  %v374 = vrot.slane %v342, 4
  %v375 = vrot.slane %v343, 4
  %v376 = vrot.slane %v344, 4
  %v393 = vadd.f32 %v313, %v361
  %v394 = vadd.f32 %v314, %v362
  %v395 = vadd.f32 %v315, %v363
  %v396 = vadd.f32 %v316, %v364
  %v397 = vadd.f32 %v317, %v365
  %v398 = vadd.f32 %v318, %v366
  %v399 = vadd.f32 %v319, %v367
  %v400 = vadd.f32 %v320, %v368
  %v401 = vadd.f32 %v321, %v369
  %v402 = vadd.f32 %v322, %v370
  %v403 = vadd.f32 %v323, %v371
  %v404 = vadd.f32 %v324, %v372
  %v405 = vadd.f32 %v325, %v373
  %v406 = vadd.f32 %v326, %v374
  %v407 = vadd.f32 %v327, %v375
  %v408 = vadd.f32 %v328, %v376
  %v409 = vmul.f32 %v8, 0.11904762
  %v410 = vmul.f32 %v10, 0.11904762
  %v411 = vmul.f32 %v12, 0.11904762
  %v412 = vmul.f32 %v14, 0.11904762
  %v413 = vmul.f32 %v16, 0.11904762
  %v414 = vmul.f32 %v18, 0.11904762
  %v415 = vmul.f32 %v20, 0.11904762
  %v416 = vmul.f32 %v22, 0.11904762
  %v417 = vmul.f32 %v24, 0.11904762
  %v418 = vmul.f32 %v26, 0.11904762
  %v419 = vmul.f32 %v28, 0.11904762
  %v420 = vmul.f32 %v30, 0.11904762
  %v421 = vmul.f32 %v32, 0.11904762
  %v422 = vmul.f32 %v34, 0.11904762
  %v423 = vmul.f32 %v36, 0.11904762
  %v424 = vmul.f32 %v38, 0.11904762
  %v441 = vrot.slane %v409, 5
  %v442 = vrot.slane %v410, 5
  %v443 = vrot.slane %v411, 5
  %v444 = vrot.slane %v412, 5
  %v445 = vrot.slane %v413, 5
  %v446 = vrot.slane %v414, 5
  %v447 = vrot.slane %v415, 5
  %v448 = vrot.slane %v416, 5
  %v449 = vrot.slane %v417, 5
  %v450 = vrot.slane %v418, 5
  %v451 = vrot.slane %v419, 5
  %v452 = vrot.slane %v420, 5
  %v453 = vrot.slane %v421, 5
  %v454 = vrot.slane %v422, 5
  %v455 = vrot.slane %v423, 5
  %v456 = vrot.slane %v424, 5
  %v473 = vadd.f32 %v393, %v441
  %v474 = vadd.f32 %v394, %v442
  %v475 = vadd.f32 %v395, %v443
  %v476 = vadd.f32 %v396, %v444
  %v477 = vadd.f32 %v397, %v445
  %v478 = vadd.f32 %v398, %v446
  %v479 = vadd.f32 %v399, %v447
  %v480 = vadd.f32 %v400, %v448
  %v481 = vadd.f32 %v401, %v449
  %v482 = vadd.f32 %v402, %v450
  %v483 = vadd.f32 %v403, %v451
  %v484 = vadd.f32 %v404, %v452
  %v485 = vadd.f32 %v405, %v453
  %v486 = vadd.f32 %v406, %v454
  %v487 = vadd.f32 %v407, %v455
  %v488 = vadd.f32 %v408, %v456
  %vm489 = vcmask 62469
  %490 = vst.msk [vmem:[%s1 + $0xb] sm:$0x20] %vm489, %v473
  %491 = vst.msk [vmem:[%s1 + $0x23] sm:$0x20] %vm489, %v474
  %492 = vst.msk [vmem:[%s1 + $0x3b] sm:$0x20] %vm489, %v475
  %493 = vst.msk [vmem:[%s1 + $0x53] sm:$0x20] %vm489, %v476
  %494 = vst.msk [vmem:[%s1 + $0x6b] sm:$0x20] %vm489, %v477
  %495 = vst.msk [vmem:[%s1 + $0x83] sm:$0x20] %vm489, %v478
  %496 = vst.msk [vmem:[%s1 + $0x9b] sm:$0x20] %vm489, %v479
  %497 = vst.msk [vmem:[%s1 + $0xb3] sm:$0x20] %vm489, %v480
  %498 = vst.msk [vmem:[%s1 + $0xcb] sm:$0x20] %vm489, %v481
  %499 = vst.msk [vmem:[%s1 + $0xe3] sm:$0x20] %vm489, %v482
  %500 = vst.msk [vmem:[%s1 + $0xfb] sm:$0x20] %vm489, %v483
  %501 = vst.msk [vmem:[%s1 + $0x113] sm:$0x20] %vm489, %v484
  %502 = vst.msk [vmem:[%s1 + $0x12b] sm:$0x20] %vm489, %v485
  %503 = vst.msk [vmem:[%s1 + $0x143] sm:$0x20] %vm489, %v486
  %504 = vst.msk [vmem:[%s1 + $0x15b] sm:$0x20] %vm489, %v487
  %505 = vst.msk [vmem:[%s1 + $0x173] sm:$0x20] %vm489, %v488
  %v506 = vmul.f32 %v9, 0.35714287
  %v507 = vmul.f32 %v11, 0.35714287
  %v508 = vmul.f32 %v13, 0.35714287
  %v509 = vmul.f32 %v15, 0.35714287
  %v510 = vmul.f32 %v17, 0.35714287
  %v511 = vmul.f32 %v19, 0.35714287
  %v512 = vmul.f32 %v21, 0.35714287
  %v513 = vmul.f32 %v23, 0.35714287
  %v514 = vmul.f32 %v25, 0.35714287
  %v515 = vmul.f32 %v27, 0.35714287
  %v516 = vmul.f32 %v29, 0.35714287
  %v517 = vmul.f32 %v31, 0.35714287
  %v518 = vmul.f32 %v33, 0.35714287
  %v519 = vmul.f32 %v35, 0.35714287
  %v520 = vmul.f32 %v37, 0.35714287
  %v521 = vmul.f32 %v39, 0.35714287
  %v522 = vmul.f32 %v9, -1.4285715
  %v523 = vmul.f32 %v11, -1.4285715
  %v524 = vmul.f32 %v13, -1.4285715
  %v525 = vmul.f32 %v15, -1.4285715
  %v526 = vmul.f32 %v17, -1.4285715
  %v527 = vmul.f32 %v19, -1.4285715
  %v528 = vmul.f32 %v21, -1.4285715
  %v529 = vmul.f32 %v23, -1.4285715
  %v530 = vmul.f32 %v25, -1.4285715
  %v531 = vmul.f32 %v27, -1.4285715
  %v532 = vmul.f32 %v29, -1.4285715
  %v533 = vmul.f32 %v31, -1.4285715
  %v534 = vmul.f32 %v33, -1.4285715
  %v535 = vmul.f32 %v35, -1.4285715
  %v536 = vmul.f32 %v37, -1.4285715
  %v537 = vmul.f32 %v39, -1.4285715
  %v554 = vrot.slane %v522, 1
  %v555 = vrot.slane %v523, 1
  %v556 = vrot.slane %v524, 1
  %v557 = vrot.slane %v525, 1
  %v558 = vrot.slane %v526, 1
  %v559 = vrot.slane %v527, 1
  %v560 = vrot.slane %v528, 1
  %v561 = vrot.slane %v529, 1
  %v562 = vrot.slane %v530, 1
  %v563 = vrot.slane %v531, 1
  %v564 = vrot.slane %v532, 1
  %v565 = vrot.slane %v533, 1
  %v566 = vrot.slane %v534, 1
  %v567 = vrot.slane %v535, 1
  %v568 = vrot.slane %v536, 1
  %v569 = vrot.slane %v537, 1
  %v586 = vadd.f32 %v506, %v554
  %v587 = vadd.f32 %v507, %v555
  %v588 = vadd.f32 %v508, %v556
  %v589 = vadd.f32 %v509, %v557
  %v590 = vadd.f32 %v510, %v558
  %v591 = vadd.f32 %v511, %v559
  %v592 = vadd.f32 %v512, %v560
  %v593 = vadd.f32 %v513, %v561
  %v594 = vadd.f32 %v514, %v562
  %v595 = vadd.f32 %v515, %v563
  %v596 = vadd.f32 %v516, %v564
  %v597 = vadd.f32 %v517, %v565
  %v598 = vadd.f32 %v518, %v566
  %v599 = vadd.f32 %v519, %v567
  %v600 = vadd.f32 %v520, %v568
  %v601 = vadd.f32 %v521, %v569
  %v602 = vadd.f32 %v586, %v201
  %v603 = vadd.f32 %v587, %v202
  %v604 = vadd.f32 %v588, %v203
  %v605 = vadd.f32 %v589, %v204
  %v606 = vadd.f32 %v590, %v205
  %v607 = vadd.f32 %v591, %v206
  %v608 = vadd.f32 %v592, %v207
  %v609 = vadd.f32 %v593, %v208
  %v610 = vadd.f32 %v594, %v209
  %v611 = vadd.f32 %v595, %v210
  %v612 = vadd.f32 %v596, %v211
  %v613 = vadd.f32 %v597, %v212
  %v614 = vadd.f32 %v598, %v213
  %v615 = vadd.f32 %v599, %v214
  %v616 = vadd.f32 %v600, %v215
  %v617 = vadd.f32 %v601, %v216
  %v618 = vmul.f32 %v8, 1.1428572
  %v619 = vmul.f32 %v10, 1.1428572
  %v620 = vmul.f32 %v12, 1.1428572
  %v621 = vmul.f32 %v14, 1.1428572
  %v622 = vmul.f32 %v16, 1.1428572
  %v623 = vmul.f32 %v18, 1.1428572
  %v624 = vmul.f32 %v20, 1.1428572
  %v625 = vmul.f32 %v22, 1.1428572
  %v626 = vmul.f32 %v24, 1.1428572
  %v627 = vmul.f32 %v26, 1.1428572
  %v628 = vmul.f32 %v28, 1.1428572
  %v629 = vmul.f32 %v30, 1.1428572
  %v630 = vmul.f32 %v32, 1.1428572
  %v631 = vmul.f32 %v34, 1.1428572
  %v632 = vmul.f32 %v36, 1.1428572
  %v633 = vmul.f32 %v38, 1.1428572
  %v650 = vrot.slane %v618, 3
  %v651 = vrot.slane %v619, 3
  %v652 = vrot.slane %v620, 3
  %v653 = vrot.slane %v621, 3
  %v654 = vrot.slane %v622, 3
  %v655 = vrot.slane %v623, 3
  %v656 = vrot.slane %v624, 3
  %v657 = vrot.slane %v625, 3
  %v658 = vrot.slane %v626, 3
  %v659 = vrot.slane %v627, 3
  %v660 = vrot.slane %v628, 3
  %v661 = vrot.slane %v629, 3
  %v662 = vrot.slane %v630, 3
  %v663 = vrot.slane %v631, 3
  %v664 = vrot.slane %v632, 3
  %v665 = vrot.slane %v633, 3
  %v682 = vadd.f32 %v602, %v650
  %v683 = vadd.f32 %v603, %v651
  %v684 = vadd.f32 %v604, %v652
  %v685 = vadd.f32 %v605, %v653
  %v686 = vadd.f32 %v606, %v654
  %v687 = vadd.f32 %v607, %v655
  %v688 = vadd.f32 %v608, %v656
  %v689 = vadd.f32 %v609, %v657
  %v690 = vadd.f32 %v610, %v658
  %v691 = vadd.f32 %v611, %v659
  %v692 = vadd.f32 %v612, %v660
  %v693 = vadd.f32 %v613, %v661
  %v694 = vadd.f32 %v614, %v662
  %v695 = vadd.f32 %v615, %v663
  %v696 = vadd.f32 %v616, %v664
  %v697 = vadd.f32 %v617, %v665
  %v698 = vmul.f32 %v8, -1.0714285
  %v699 = vmul.f32 %v10, -1.0714285
  %v700 = vmul.f32 %v12, -1.0714285
  %v701 = vmul.f32 %v14, -1.0714285
  %v702 = vmul.f32 %v16, -1.0714285
  %v703 = vmul.f32 %v18, -1.0714285
  %v704 = vmul.f32 %v20, -1.0714285
  %v705 = vmul.f32 %v22, -1.0714285
  %v706 = vmul.f32 %v24, -1.0714285
  %v707 = vmul.f32 %v26, -1.0714285
  %v708 = vmul.f32 %v28, -1.0714285
  %v709 = vmul.f32 %v30, -1.0714285
  %v710 = vmul.f32 %v32, -1.0714285
  %v711 = vmul.f32 %v34, -1.0714285
  %v712 = vmul.f32 %v36, -1.0714285
  %v713 = vmul.f32 %v38, -1.0714285
  %v730 = vrot.slane %v698, 4
  %v731 = vrot.slane %v699, 4
  %v732 = vrot.slane %v700, 4
  %v733 = vrot.slane %v701, 4
  %v734 = vrot.slane %v702, 4
  %v735 = vrot.slane %v703, 4
  %v736 = vrot.slane %v704, 4
  %v737 = vrot.slane %v705, 4
  %v738 = vrot.slane %v706, 4
  %v739 = vrot.slane %v707, 4
  %v740 = vrot.slane %v708, 4
  %v741 = vrot.slane %v709, 4
  %v742 = vrot.slane %v710, 4
  %v743 = vrot.slane %v711, 4
  %v744 = vrot.slane %v712, 4
  %v745 = vrot.slane %v713, 4
  %v762 = vadd.f32 %v682, %v730
  %v763 = vadd.f32 %v683, %v731
  %v764 = vadd.f32 %v684, %v732
  %v765 = vadd.f32 %v685, %v733
  %v766 = vadd.f32 %v686, %v734
  %v767 = vadd.f32 %v687, %v735
  %v768 = vadd.f32 %v688, %v736
  %v769 = vadd.f32 %v689, %v737
  %v770 = vadd.f32 %v690, %v738
  %v771 = vadd.f32 %v691, %v739
  %v772 = vadd.f32 %v692, %v740
  %v773 = vadd.f32 %v693, %v741
  %v774 = vadd.f32 %v694, %v742
  %v775 = vadd.f32 %v695, %v743
  %v776 = vadd.f32 %v696, %v744
  %v777 = vadd.f32 %v697, %v745
  %v778 = vmul.f32 %v8, 0.2857143
  %v779 = vmul.f32 %v10, 0.2857143
  %v780 = vmul.f32 %v12, 0.2857143
  %v781 = vmul.f32 %v14, 0.2857143
  %v782 = vmul.f32 %v16, 0.2857143
  %v783 = vmul.f32 %v18, 0.2857143
  %v784 = vmul.f32 %v20, 0.2857143
  %v785 = vmul.f32 %v22, 0.2857143
  %v786 = vmul.f32 %v24, 0.2857143
  %v787 = vmul.f32 %v26, 0.2857143
  %v788 = vmul.f32 %v28, 0.2857143
  %v789 = vmul.f32 %v30, 0.2857143
  %v790 = vmul.f32 %v32, 0.2857143
  %v791 = vmul.f32 %v34, 0.2857143
  %v792 = vmul.f32 %v36, 0.2857143
  %v793 = vmul.f32 %v38, 0.2857143
  %v810 = vrot.slane %v778, 5
  %v811 = vrot.slane %v779, 5
  %v812 = vrot.slane %v780, 5
  %v813 = vrot.slane %v781, 5
  %v814 = vrot.slane %v782, 5
  %v815 = vrot.slane %v783, 5
  %v816 = vrot.slane %v784, 5
  %v817 = vrot.slane %v785, 5
  %v818 = vrot.slane %v786, 5
  %v819 = vrot.slane %v787, 5
  %v820 = vrot.slane %v788, 5
  %v821 = vrot.slane %v789, 5
  %v822 = vrot.slane %v790, 5
  %v823 = vrot.slane %v791, 5
  %v824 = vrot.slane %v792, 5
  %v825 = vrot.slane %v793, 5
  %v842 = vadd.f32 %v762, %v810
  %v843 = vadd.f32 %v763, %v811
  %v844 = vadd.f32 %v764, %v812
  %v845 = vadd.f32 %v765, %v813
  %v846 = vadd.f32 %v766, %v814
  %v847 = vadd.f32 %v767, %v815
  %v848 = vadd.f32 %v768, %v816
  %v849 = vadd.f32 %v769, %v817
  %v850 = vadd.f32 %v770, %v818
  %v851 = vadd.f32 %v771, %v819
  %v852 = vadd.f32 %v772, %v820
  %v853 = vadd.f32 %v773, %v821
  %v854 = vadd.f32 %v774, %v822
  %v855 = vadd.f32 %v775, %v823
  %v856 = vadd.f32 %v776, %v824
  %v857 = vadd.f32 %v777, %v825
  %858 = vst.msk [vmem:[%s1 + $0xc] sm:$0x20] %vm489, %v842
  %859 = vst.msk [vmem:[%s1 + $0x24] sm:$0x20] %vm489, %v843
  %860 = vst.msk [vmem:[%s1 + $0x3c] sm:$0x20] %vm489, %v844
  %861 = vst.msk [vmem:[%s1 + $0x54] sm:$0x20] %vm489, %v845
  %862 = vst.msk [vmem:[%s1 + $0x6c] sm:$0x20] %vm489, %v846
  %863 = vst.msk [vmem:[%s1 + $0x84] sm:$0x20] %vm489, %v847
  %864 = vst.msk [vmem:[%s1 + $0x9c] sm:$0x20] %vm489, %v848
  %865 = vst.msk [vmem:[%s1 + $0xb4] sm:$0x20] %vm489, %v849
  %866 = vst.msk [vmem:[%s1 + $0xcc] sm:$0x20] %vm489, %v850
  %867 = vst.msk [vmem:[%s1 + $0xe4] sm:$0x20] %vm489, %v851
  %868 = vst.msk [vmem:[%s1 + $0xfc] sm:$0x20] %vm489, %v852
  %869 = vst.msk [vmem:[%s1 + $0x114] sm:$0x20] %vm489, %v853
  %870 = vst.msk [vmem:[%s1 + $0x12c] sm:$0x20] %vm489, %v854
  %871 = vst.msk [vmem:[%s1 + $0x144] sm:$0x20] %vm489, %v855
  %872 = vst.msk [vmem:[%s1 + $0x15c] sm:$0x20] %vm489, %v856
  %873 = vst.msk [vmem:[%s1 + $0x174] sm:$0x20] %vm489, %v857
  %v874 = vmul.f32 %v9, 0.2857143
  %v875 = vmul.f32 %v11, 0.2857143
  %v876 = vmul.f32 %v13, 0.2857143
  %v877 = vmul.f32 %v15, 0.2857143
  %v878 = vmul.f32 %v17, 0.2857143
  %v879 = vmul.f32 %v19, 0.2857143
  %v880 = vmul.f32 %v21, 0.2857143
  %v881 = vmul.f32 %v23, 0.2857143
  %v882 = vmul.f32 %v25, 0.2857143
  %v883 = vmul.f32 %v27, 0.2857143
  %v884 = vmul.f32 %v29, 0.2857143
  %v885 = vmul.f32 %v31, 0.2857143
  %v886 = vmul.f32 %v33, 0.2857143
  %v887 = vmul.f32 %v35, 0.2857143
  %v888 = vmul.f32 %v37, 0.2857143
  %v889 = vmul.f32 %v39, 0.2857143
  %v890 = vadd.f32 %v874, %v121
  %v891 = vadd.f32 %v875, %v122
  %v892 = vadd.f32 %v876, %v123
  %v893 = vadd.f32 %v877, %v124
  %v894 = vadd.f32 %v878, %v125
  %v895 = vadd.f32 %v879, %v126
  %v896 = vadd.f32 %v880, %v127
  %v897 = vadd.f32 %v881, %v128
  %v898 = vadd.f32 %v882, %v129
  %v899 = vadd.f32 %v883, %v130
  %v900 = vadd.f32 %v884, %v131
  %v901 = vadd.f32 %v885, %v132
  %v902 = vadd.f32 %v886, %v133
  %v903 = vadd.f32 %v887, %v134
  %v904 = vadd.f32 %v888, %v135
  %v905 = vadd.f32 %v889, %v136
  %v906 = vmul.f32 %v9, 1.1428572
  %v907 = vmul.f32 %v11, 1.1428572
  %v908 = vmul.f32 %v13, 1.1428572
  %v909 = vmul.f32 %v15, 1.1428572
  %v910 = vmul.f32 %v17, 1.1428572
  %v911 = vmul.f32 %v19, 1.1428572
  %v912 = vmul.f32 %v21, 1.1428572
  %v913 = vmul.f32 %v23, 1.1428572
  %v914 = vmul.f32 %v25, 1.1428572
  %v915 = vmul.f32 %v27, 1.1428572
  %v916 = vmul.f32 %v29, 1.1428572
  %v917 = vmul.f32 %v31, 1.1428572
  %v918 = vmul.f32 %v33, 1.1428572
  %v919 = vmul.f32 %v35, 1.1428572
  %v920 = vmul.f32 %v37, 1.1428572
  %v921 = vmul.f32 %v39, 1.1428572
  %v938 = vrot.slane %v906, 2
  %v939 = vrot.slane %v907, 2
  %v940 = vrot.slane %v908, 2
  %v941 = vrot.slane %v909, 2
  %v942 = vrot.slane %v910, 2
  %v943 = vrot.slane %v911, 2
  %v944 = vrot.slane %v912, 2
  %v945 = vrot.slane %v913, 2
  %v946 = vrot.slane %v914, 2
  %v947 = vrot.slane %v915, 2
  %v948 = vrot.slane %v916, 2
  %v949 = vrot.slane %v917, 2
  %v950 = vrot.slane %v918, 2
  %v951 = vrot.slane %v919, 2
  %v952 = vrot.slane %v920, 2
  %v953 = vrot.slane %v921, 2
  %v970 = vadd.f32 %v890, %v938
  %v971 = vadd.f32 %v891, %v939
  %v972 = vadd.f32 %v892, %v940
  %v973 = vadd.f32 %v893, %v941
  %v974 = vadd.f32 %v894, %v942
  %v975 = vadd.f32 %v895, %v943
  %v976 = vadd.f32 %v896, %v944
  %v977 = vadd.f32 %v897, %v945
  %v978 = vadd.f32 %v898, %v946
  %v979 = vadd.f32 %v899, %v947
  %v980 = vadd.f32 %v900, %v948
  %v981 = vadd.f32 %v901, %v949
  %v982 = vadd.f32 %v902, %v950
  %v983 = vadd.f32 %v903, %v951
  %v984 = vadd.f32 %v904, %v952
  %v985 = vadd.f32 %v905, %v953
  %v986 = vmul.f32 %v8, 1.7142857
  %v987 = vmul.f32 %v10, 1.7142857
  %v988 = vmul.f32 %v12, 1.7142857
  %v989 = vmul.f32 %v14, 1.7142857
  %v990 = vmul.f32 %v16, 1.7142857
  %v991 = vmul.f32 %v18, 1.7142857
  %v992 = vmul.f32 %v20, 1.7142857
  %v993 = vmul.f32 %v22, 1.7142857
  %v994 = vmul.f32 %v24, 1.7142857
  %v995 = vmul.f32 %v26, 1.7142857
  %v996 = vmul.f32 %v28, 1.7142857
  %v997 = vmul.f32 %v30, 1.7142857
  %v998 = vmul.f32 %v32, 1.7142857
  %v999 = vmul.f32 %v34, 1.7142857
  %v1000 = vmul.f32 %v36, 1.7142857
  %v1001 = vmul.f32 %v38, 1.7142857
  %v1018 = vrot.slane %v986, 3
  %v1019 = vrot.slane %v987, 3
  %v1020 = vrot.slane %v988, 3
  %v1021 = vrot.slane %v989, 3
  %v1022 = vrot.slane %v990, 3
  %v1023 = vrot.slane %v991, 3
  %v1024 = vrot.slane %v992, 3
  %v1025 = vrot.slane %v993, 3
  %v1026 = vrot.slane %v994, 3
  %v1027 = vrot.slane %v995, 3
  %v1028 = vrot.slane %v996, 3
  %v1029 = vrot.slane %v997, 3
  %v1030 = vrot.slane %v998, 3
  %v1031 = vrot.slane %v999, 3
  %v1032 = vrot.slane %v1000, 3
  %v1033 = vrot.slane %v1001, 3
  %v1050 = vadd.f32 %v970, %v1018
  %v1051 = vadd.f32 %v971, %v1019
  %v1052 = vadd.f32 %v972, %v1020
  %v1053 = vadd.f32 %v973, %v1021
  %v1054 = vadd.f32 %v974, %v1022
  %v1055 = vadd.f32 %v975, %v1023
  %v1056 = vadd.f32 %v976, %v1024
  %v1057 = vadd.f32 %v977, %v1025
  %v1058 = vadd.f32 %v978, %v1026
  %v1059 = vadd.f32 %v979, %v1027
  %v1060 = vadd.f32 %v980, %v1028
  %v1061 = vadd.f32 %v981, %v1029
  %v1062 = vadd.f32 %v982, %v1030
  %v1063 = vadd.f32 %v983, %v1031
  %v1064 = vadd.f32 %v984, %v1032
  %v1065 = vadd.f32 %v985, %v1033
  %v1066 = vmul.f32 %v8, -1.4285715
  %v1067 = vmul.f32 %v10, -1.4285715
  %v1068 = vmul.f32 %v12, -1.4285715
  %v1069 = vmul.f32 %v14, -1.4285715
  %v1070 = vmul.f32 %v16, -1.4285715
  %v1071 = vmul.f32 %v18, -1.4285715
  %v1072 = vmul.f32 %v20, -1.4285715
  %v1073 = vmul.f32 %v22, -1.4285715
  %v1074 = vmul.f32 %v24, -1.4285715
  %v1075 = vmul.f32 %v26, -1.4285715
  %v1076 = vmul.f32 %v28, -1.4285715
  %v1077 = vmul.f32 %v30, -1.4285715
  %v1078 = vmul.f32 %v32, -1.4285715
  %v1079 = vmul.f32 %v34, -1.4285715
  %v1080 = vmul.f32 %v36, -1.4285715
  %v1081 = vmul.f32 %v38, -1.4285715
  %v1098 = vrot.slane %v1066, 4
  %v1099 = vrot.slane %v1067, 4
  %v1100 = vrot.slane %v1068, 4
  %v1101 = vrot.slane %v1069, 4
  %v1102 = vrot.slane %v1070, 4
  %v1103 = vrot.slane %v1071, 4
  %v1104 = vrot.slane %v1072, 4
  %v1105 = vrot.slane %v1073, 4
  %v1106 = vrot.slane %v1074, 4
  %v1107 = vrot.slane %v1075, 4
  %v1108 = vrot.slane %v1076, 4
  %v1109 = vrot.slane %v1077, 4
  %v1110 = vrot.slane %v1078, 4
  %v1111 = vrot.slane %v1079, 4
  %v1112 = vrot.slane %v1080, 4
  %v1113 = vrot.slane %v1081, 4
  %v1130 = vadd.f32 %v1050, %v1098
  %v1131 = vadd.f32 %v1051, %v1099
  %v1132 = vadd.f32 %v1052, %v1100
  %v1133 = vadd.f32 %v1053, %v1101
  %v1134 = vadd.f32 %v1054, %v1102
  %v1135 = vadd.f32 %v1055, %v1103
  %v1136 = vadd.f32 %v1056, %v1104
  %v1137 = vadd.f32 %v1057, %v1105
  %v1138 = vadd.f32 %v1058, %v1106
  %v1139 = vadd.f32 %v1059, %v1107
  %v1140 = vadd.f32 %v1060, %v1108
  %v1141 = vadd.f32 %v1061, %v1109
  %v1142 = vadd.f32 %v1062, %v1110
  %v1143 = vadd.f32 %v1063, %v1111
  %v1144 = vadd.f32 %v1064, %v1112
  %v1145 = vadd.f32 %v1065, %v1113
  %v1146 = vmul.f32 %v8, 0.35714287
  %v1147 = vmul.f32 %v10, 0.35714287
  %v1148 = vmul.f32 %v12, 0.35714287
  %v1149 = vmul.f32 %v14, 0.35714287
  %v1150 = vmul.f32 %v16, 0.35714287
  %v1151 = vmul.f32 %v18, 0.35714287
  %v1152 = vmul.f32 %v20, 0.35714287
  %v1153 = vmul.f32 %v22, 0.35714287
  %v1154 = vmul.f32 %v24, 0.35714287
  %v1155 = vmul.f32 %v26, 0.35714287
  %v1156 = vmul.f32 %v28, 0.35714287
  %v1157 = vmul.f32 %v30, 0.35714287
  %v1158 = vmul.f32 %v32, 0.35714287
  %v1159 = vmul.f32 %v34, 0.35714287
  %v1160 = vmul.f32 %v36, 0.35714287
  %v1161 = vmul.f32 %v38, 0.35714287
  %v1178 = vrot.slane %v1146, 5
  %v1179 = vrot.slane %v1147, 5
  %v1180 = vrot.slane %v1148, 5
  %v1181 = vrot.slane %v1149, 5
  %v1182 = vrot.slane %v1150, 5
  %v1183 = vrot.slane %v1151, 5
  %v1184 = vrot.slane %v1152, 5
  %v1185 = vrot.slane %v1153, 5
  %v1186 = vrot.slane %v1154, 5
  %v1187 = vrot.slane %v1155, 5
  %v1188 = vrot.slane %v1156, 5
  %v1189 = vrot.slane %v1157, 5
  %v1190 = vrot.slane %v1158, 5
  %v1191 = vrot.slane %v1159, 5
  %v1192 = vrot.slane %v1160, 5
  %v1193 = vrot.slane %v1161, 5
  %v1210 = vadd.f32 %v1130, %v1178
  %v1211 = vadd.f32 %v1131, %v1179
  %v1212 = vadd.f32 %v1132, %v1180
  %v1213 = vadd.f32 %v1133, %v1181
  %v1214 = vadd.f32 %v1134, %v1182
  %v1215 = vadd.f32 %v1135, %v1183
  %v1216 = vadd.f32 %v1136, %v1184
  %v1217 = vadd.f32 %v1137, %v1185
  %v1218 = vadd.f32 %v1138, %v1186
  %v1219 = vadd.f32 %v1139, %v1187
  %v1220 = vadd.f32 %v1140, %v1188
  %v1221 = vadd.f32 %v1141, %v1189
  %v1222 = vadd.f32 %v1142, %v1190
  %v1223 = vadd.f32 %v1143, %v1191
  %v1224 = vadd.f32 %v1144, %v1192
  %v1225 = vadd.f32 %v1145, %v1193
  %1226 = vst.msk [vmem:[%s1 + $0xd] sm:$0x20] %vm489, %v1210
  %1227 = vst.msk [vmem:[%s1 + $0x25] sm:$0x20] %vm489, %v1211
  %1228 = vst.msk [vmem:[%s1 + $0x3d] sm:$0x20] %vm489, %v1212
  %1229 = vst.msk [vmem:[%s1 + $0x55] sm:$0x20] %vm489, %v1213
  %1230 = vst.msk [vmem:[%s1 + $0x6d] sm:$0x20] %vm489, %v1214
  %1231 = vst.msk [vmem:[%s1 + $0x85] sm:$0x20] %vm489, %v1215
  %1232 = vst.msk [vmem:[%s1 + $0x9d] sm:$0x20] %vm489, %v1216
  %1233 = vst.msk [vmem:[%s1 + $0xb5] sm:$0x20] %vm489, %v1217
  %1234 = vst.msk [vmem:[%s1 + $0xcd] sm:$0x20] %vm489, %v1218
  %1235 = vst.msk [vmem:[%s1 + $0xe5] sm:$0x20] %vm489, %v1219
  %1236 = vst.msk [vmem:[%s1 + $0xfd] sm:$0x20] %vm489, %v1220
  %1237 = vst.msk [vmem:[%s1 + $0x115] sm:$0x20] %vm489, %v1221
  %1238 = vst.msk [vmem:[%s1 + $0x12d] sm:$0x20] %vm489, %v1222
  %1239 = vst.msk [vmem:[%s1 + $0x145] sm:$0x20] %vm489, %v1223
  %1240 = vst.msk [vmem:[%s1 + $0x15d] sm:$0x20] %vm489, %v1224
  %1241 = vst.msk [vmem:[%s1 + $0x175] sm:$0x20] %vm489, %v1225
  %v1242 = vmul.f32 %v9, 0.11904762
  %v1243 = vmul.f32 %v11, 0.11904762
  %v1244 = vmul.f32 %v13, 0.11904762
  %v1245 = vmul.f32 %v15, 0.11904762
  %v1246 = vmul.f32 %v17, 0.11904762
  %v1247 = vmul.f32 %v19, 0.11904762
  %v1248 = vmul.f32 %v21, 0.11904762
  %v1249 = vmul.f32 %v23, 0.11904762
  %v1250 = vmul.f32 %v25, 0.11904762
  %v1251 = vmul.f32 %v27, 0.11904762
  %v1252 = vmul.f32 %v29, 0.11904762
  %v1253 = vmul.f32 %v31, 0.11904762
  %v1254 = vmul.f32 %v33, 0.11904762
  %v1255 = vmul.f32 %v35, 0.11904762
  %v1256 = vmul.f32 %v37, 0.11904762
  %v1257 = vmul.f32 %v39, 0.11904762
  %v1258 = vmul.f32 %v9, -0.42857143
  %v1259 = vmul.f32 %v11, -0.42857143
  %v1260 = vmul.f32 %v13, -0.42857143
  %v1261 = vmul.f32 %v15, -0.42857143
  %v1262 = vmul.f32 %v17, -0.42857143
  %v1263 = vmul.f32 %v19, -0.42857143
  %v1264 = vmul.f32 %v21, -0.42857143
  %v1265 = vmul.f32 %v23, -0.42857143
  %v1266 = vmul.f32 %v25, -0.42857143
  %v1267 = vmul.f32 %v27, -0.42857143
  %v1268 = vmul.f32 %v29, -0.42857143
  %v1269 = vmul.f32 %v31, -0.42857143
  %v1270 = vmul.f32 %v33, -0.42857143
  %v1271 = vmul.f32 %v35, -0.42857143
  %v1272 = vmul.f32 %v37, -0.42857143
  %v1273 = vmul.f32 %v39, -0.42857143
  %v1290 = vrot.slane %v1258, 1
  %v1291 = vrot.slane %v1259, 1
  %v1292 = vrot.slane %v1260, 1
  %v1293 = vrot.slane %v1261, 1
  %v1294 = vrot.slane %v1262, 1
  %v1295 = vrot.slane %v1263, 1
  %v1296 = vrot.slane %v1264, 1
  %v1297 = vrot.slane %v1265, 1
  %v1298 = vrot.slane %v1266, 1
  %v1299 = vrot.slane %v1267, 1
  %v1300 = vrot.slane %v1268, 1
  %v1301 = vrot.slane %v1269, 1
  %v1302 = vrot.slane %v1270, 1
  %v1303 = vrot.slane %v1271, 1
  %v1304 = vrot.slane %v1272, 1
  %v1305 = vrot.slane %v1273, 1
  %v1322 = vadd.f32 %v1242, %v1290
  %v1323 = vadd.f32 %v1243, %v1291
  %v1324 = vadd.f32 %v1244, %v1292
  %v1325 = vadd.f32 %v1245, %v1293
  %v1326 = vadd.f32 %v1246, %v1294
  %v1327 = vadd.f32 %v1247, %v1295
  %v1328 = vadd.f32 %v1248, %v1296
  %v1329 = vadd.f32 %v1249, %v1297
  %v1330 = vadd.f32 %v1250, %v1298
  %v1331 = vadd.f32 %v1251, %v1299
  %v1332 = vadd.f32 %v1252, %v1300
  %v1333 = vadd.f32 %v1253, %v1301
  %v1334 = vadd.f32 %v1254, %v1302
  %v1335 = vadd.f32 %v1255, %v1303
  %v1336 = vadd.f32 %v1256, %v1304
  %v1337 = vadd.f32 %v1257, %v1305
  %v1338 = vmul.f32 %v9, 0.42857143
  %v1339 = vmul.f32 %v11, 0.42857143
  %v1340 = vmul.f32 %v13, 0.42857143
  %v1341 = vmul.f32 %v15, 0.42857143
  %v1342 = vmul.f32 %v17, 0.42857143
  %v1343 = vmul.f32 %v19, 0.42857143
  %v1344 = vmul.f32 %v21, 0.42857143
  %v1345 = vmul.f32 %v23, 0.42857143
  %v1346 = vmul.f32 %v25, 0.42857143
  %v1347 = vmul.f32 %v27, 0.42857143
  %v1348 = vmul.f32 %v29, 0.42857143
  %v1349 = vmul.f32 %v31, 0.42857143
  %v1350 = vmul.f32 %v33, 0.42857143
  %v1351 = vmul.f32 %v35, 0.42857143
  %v1352 = vmul.f32 %v37, 0.42857143
  %v1353 = vmul.f32 %v39, 0.42857143
  %v1370 = vrot.slane %v1338, 2
  %v1371 = vrot.slane %v1339, 2
  %v1372 = vrot.slane %v1340, 2
  %v1373 = vrot.slane %v1341, 2
  %v1374 = vrot.slane %v1342, 2
  %v1375 = vrot.slane %v1343, 2
  %v1376 = vrot.slane %v1344, 2
  %v1377 = vrot.slane %v1345, 2
  %v1378 = vrot.slane %v1346, 2
  %v1379 = vrot.slane %v1347, 2
  %v1380 = vrot.slane %v1348, 2
  %v1381 = vrot.slane %v1349, 2
  %v1382 = vrot.slane %v1350, 2
  %v1383 = vrot.slane %v1351, 2
  %v1384 = vrot.slane %v1352, 2
  %v1385 = vrot.slane %v1353, 2
  %v1402 = vadd.f32 %v1322, %v1370
  %v1403 = vadd.f32 %v1323, %v1371
  %v1404 = vadd.f32 %v1324, %v1372
  %v1405 = vadd.f32 %v1325, %v1373
  %v1406 = vadd.f32 %v1326, %v1374
  %v1407 = vadd.f32 %v1327, %v1375
  %v1408 = vadd.f32 %v1328, %v1376
  %v1409 = vadd.f32 %v1329, %v1377
  %v1410 = vadd.f32 %v1330, %v1378
  %v1411 = vadd.f32 %v1331, %v1379
  %v1412 = vadd.f32 %v1332, %v1380
  %v1413 = vadd.f32 %v1333, %v1381
  %v1414 = vadd.f32 %v1334, %v1382
  %v1415 = vadd.f32 %v1335, %v1383
  %v1416 = vadd.f32 %v1336, %v1384
  %v1417 = vadd.f32 %v1337, %v1385
  %v1418 = vadd.f32 %v1402, %v1018
  %v1419 = vadd.f32 %v1403, %v1019
  %v1420 = vadd.f32 %v1404, %v1020
  %v1421 = vadd.f32 %v1405, %v1021
  %v1422 = vadd.f32 %v1406, %v1022
  %v1423 = vadd.f32 %v1407, %v1023
  %v1424 = vadd.f32 %v1408, %v1024
  %v1425 = vadd.f32 %v1409, %v1025
  %v1426 = vadd.f32 %v1410, %v1026
  %v1427 = vadd.f32 %v1411, %v1027
  %v1428 = vadd.f32 %v1412, %v1028
  %v1429 = vadd.f32 %v1413, %v1029
  %v1430 = vadd.f32 %v1414, %v1030
  %v1431 = vadd.f32 %v1415, %v1031
  %v1432 = vadd.f32 %v1416, %v1032
  %v1433 = vadd.f32 %v1417, %v1033
  %v1434 = vadd.f32 %v1418, %v730
  %v1435 = vadd.f32 %v1419, %v731
  %v1436 = vadd.f32 %v1420, %v732
  %v1437 = vadd.f32 %v1421, %v733
  %v1438 = vadd.f32 %v1422, %v734
  %v1439 = vadd.f32 %v1423, %v735
  %v1440 = vadd.f32 %v1424, %v736
  %v1441 = vadd.f32 %v1425, %v737
  %v1442 = vadd.f32 %v1426, %v738
  %v1443 = vadd.f32 %v1427, %v739
  %v1444 = vadd.f32 %v1428, %v740
  %v1445 = vadd.f32 %v1429, %v741
  %v1446 = vadd.f32 %v1430, %v742
  %v1447 = vadd.f32 %v1431, %v743
  %v1448 = vadd.f32 %v1432, %v744
  %v1449 = vadd.f32 %v1433, %v745
  %v1450 = vmul.f32 %v8, 0.23809524
  %v1451 = vmul.f32 %v10, 0.23809524
  %v1452 = vmul.f32 %v12, 0.23809524
  %v1453 = vmul.f32 %v14, 0.23809524
  %v1454 = vmul.f32 %v16, 0.23809524
  %v1455 = vmul.f32 %v18, 0.23809524
  %v1456 = vmul.f32 %v20, 0.23809524
  %v1457 = vmul.f32 %v22, 0.23809524
  %v1458 = vmul.f32 %v24, 0.23809524
  %v1459 = vmul.f32 %v26, 0.23809524
  %v1460 = vmul.f32 %v28, 0.23809524
  %v1461 = vmul.f32 %v30, 0.23809524
  %v1462 = vmul.f32 %v32, 0.23809524
  %v1463 = vmul.f32 %v34, 0.23809524
  %v1464 = vmul.f32 %v36, 0.23809524
  %v1465 = vmul.f32 %v38, 0.23809524
  %v1482 = vrot.slane %v1450, 5
  %v1483 = vrot.slane %v1451, 5
  %v1484 = vrot.slane %v1452, 5
  %v1485 = vrot.slane %v1453, 5
  %v1486 = vrot.slane %v1454, 5
  %v1487 = vrot.slane %v1455, 5
  %v1488 = vrot.slane %v1456, 5
  %v1489 = vrot.slane %v1457, 5
  %v1490 = vrot.slane %v1458, 5
  %v1491 = vrot.slane %v1459, 5
  %v1492 = vrot.slane %v1460, 5
  %v1493 = vrot.slane %v1461, 5
  %v1494 = vrot.slane %v1462, 5
  %v1495 = vrot.slane %v1463, 5
  %v1496 = vrot.slane %v1464, 5
  %v1497 = vrot.slane %v1465, 5
  %v1514 = vadd.f32 %v1434, %v1482
  %v1515 = vadd.f32 %v1435, %v1483
  %v1516 = vadd.f32 %v1436, %v1484
  %v1517 = vadd.f32 %v1437, %v1485
  %v1518 = vadd.f32 %v1438, %v1486
  %v1519 = vadd.f32 %v1439, %v1487
  %v1520 = vadd.f32 %v1440, %v1488
  %v1521 = vadd.f32 %v1441, %v1489
  %v1522 = vadd.f32 %v1442, %v1490
  %v1523 = vadd.f32 %v1443, %v1491
  %v1524 = vadd.f32 %v1444, %v1492
  %v1525 = vadd.f32 %v1445, %v1493
  %v1526 = vadd.f32 %v1446, %v1494
  %v1527 = vadd.f32 %v1447, %v1495
  %v1528 = vadd.f32 %v1448, %v1496
  %v1529 = vadd.f32 %v1449, %v1497
  %1530 = vst.msk [vmem:[%s1 + $0xe] sm:$0x20] %vm489, %v1514
  %1531 = vst.msk [vmem:[%s1 + $0x26] sm:$0x20] %vm489, %v1515
  %1532 = vst.msk [vmem:[%s1 + $0x3e] sm:$0x20] %vm489, %v1516
  %1533 = vst.msk [vmem:[%s1 + $0x56] sm:$0x20] %vm489, %v1517
  %1534 = vst.msk [vmem:[%s1 + $0x6e] sm:$0x20] %vm489, %v1518
  %1535 = vst.msk [vmem:[%s1 + $0x86] sm:$0x20] %vm489, %v1519
  %1536 = vst.msk [vmem:[%s1 + $0x9e] sm:$0x20] %vm489, %v1520
  %1537 = vst.msk [vmem:[%s1 + $0xb6] sm:$0x20] %vm489, %v1521
  %1538 = vst.msk [vmem:[%s1 + $0xce] sm:$0x20] %vm489, %v1522
  %1539 = vst.msk [vmem:[%s1 + $0xe6] sm:$0x20] %vm489, %v1523
  %1540 = vst.msk [vmem:[%s1 + $0xfe] sm:$0x20] %vm489, %v1524
  %1541 = vst.msk [vmem:[%s1 + $0x116] sm:$0x20] %vm489, %v1525
  %1542 = vst.msk [vmem:[%s1 + $0x12e] sm:$0x20] %vm489, %v1526
  %1543 = vst.msk [vmem:[%s1 + $0x146] sm:$0x20] %vm489, %v1527
  %1544 = vst.msk [vmem:[%s1 + $0x15e] sm:$0x20] %vm489, %v1528
  %1545 = vst.msk [vmem:[%s1 + $0x176] sm:$0x20] %vm489, %v1529
  %s1546 = scalar_lea.vmem %s1, 312
  %v1547 = vld [vmem:[%s1546] sm:$0xff]
  %v1548 = vld [vmem:[%s1546 + $0x8] sm:$0xff]
  %v1549 = vld [vmem:[%s1546 + $0x10] sm:$0xf]
  %v1550 = vld [vmem:[%s1546 + $0x18] sm:$0xff]
  %v1551 = vld [vmem:[%s1546 + $0x20] sm:$0xff]
  %v1552 = vld [vmem:[%s1546 + $0x28] sm:$0xf]
  %v1553 = vld [vmem:[%s1546 + $0x30] sm:$0xff]
  %v1554 = vld [vmem:[%s1546 + $0x38] sm:$0xff]
  %v1555 = vld [vmem:[%s1546 + $0x40] sm:$0xf]
  %v1556 = vld [vmem:[%s1] sm:$0xff]
  %v1557 = vld [vmem:[%s1 + $0x8] sm:$0xff]
  %v1558 = vld [vmem:[%s1 + $0x10] sm:$0xf]
  %v1559 = vld [vmem:[%s1 + $0x18] sm:$0xff]
  %v1560 = vld [vmem:[%s1 + $0x20] sm:$0xff]
  %v1561 = vld [vmem:[%s1 + $0x28] sm:$0xf]
  %v1562 = vld [vmem:[%s1 + $0x30] sm:$0xff]
  %v1563 = vld [vmem:[%s1 + $0x38] sm:$0xff]
  %v1564 = vld [vmem:[%s1 + $0x40] sm:$0xf]
  %v1565 = vmul.f32 %v1547, 0.23809524
  %v1566 = vmul.f32 %v1548, 0.23809524
  %v1567 = vmul.f32 %v1549, 0.23809524
  %v1568 = vmul.f32 %v1550, -1.0714285
  %v1569 = vmul.f32 %v1551, -1.0714285
  %v1570 = vmul.f32 %v1552, -1.0714285
  %v1571 = vadd.f32 %v1565, %v1568
  %v1572 = vadd.f32 %v1566, %v1569
  %v1573 = vadd.f32 %v1567, %v1570
  %v1574 = vmul.f32 %v1553, 1.7142857
  %v1575 = vmul.f32 %v1554, 1.7142857
  %v1576 = vmul.f32 %v1555, 1.7142857
  %v1577 = vadd.f32 %v1571, %v1574
  %v1578 = vadd.f32 %v1572, %v1575
  %v1579 = vadd.f32 %v1573, %v1576
  %v1580 = vmul.f32 %v1556, 0.42857143
  %v1581 = vmul.f32 %v1557, 0.42857143
  %v1582 = vmul.f32 %v1558, 0.42857143
  %v1583 = vadd.f32 %v1577, %v1580
  %v1584 = vadd.f32 %v1578, %v1581
  %v1585 = vadd.f32 %v1579, %v1582
  %v1586 = vmul.f32 %v1559, -0.42857143
  %v1587 = vmul.f32 %v1560, -0.42857143
  %v1588 = vmul.f32 %v1561, -0.42857143
  %v1589 = vadd.f32 %v1583, %v1586
  %v1590 = vadd.f32 %v1584, %v1587
  %v1591 = vadd.f32 %v1585, %v1588
  %v1592 = vmul.f32 %v1562, 0.11904762
  %v1593 = vmul.f32 %v1563, 0.11904762
  %v1594 = vmul.f32 %v1564, 0.11904762
  %v1595 = vadd.f32 %v1589, %v1592
  %v1596 = vadd.f32 %v1590, %v1593
  %v1597 = vadd.f32 %v1591, %v1594
  %s1598 = scalar_lea.vmem %s1, 384
  %1599 = vst.msk [vmem:[%s1598] sm:$0xff] %vm40, %v1595
  %1600 = vst.msk [vmem:[%s1598 + $0x8] sm:$0xff] %vm40, %v1596
  %vm1601 = vcmask 60416
  %1602 = vst.msk [vmem:[%s1598 + $0x10] sm:$0xf] %vm1601, %v1597
  %v1603 = vmul.f32 %v1547, 0.35714287
  %v1604 = vmul.f32 %v1548, 0.35714287
  %v1605 = vmul.f32 %v1549, 0.35714287
  %v1606 = vmul.f32 %v1550, -1.4285715
  %v1607 = vmul.f32 %v1551, -1.4285715
  %v1608 = vmul.f32 %v1552, -1.4285715
  %v1609 = vadd.f32 %v1603, %v1606
  %v1610 = vadd.f32 %v1604, %v1607
  %v1611 = vadd.f32 %v1605, %v1608
  %v1612 = vadd.f32 %v1609, %v1574
  %v1613 = vadd.f32 %v1610, %v1575
  %v1614 = vadd.f32 %v1611, %v1576
  %v1615 = vmul.f32 %v1556, 1.1428572
  %v1616 = vmul.f32 %v1557, 1.1428572
  %v1617 = vmul.f32 %v1558, 1.1428572
  %v1618 = vadd.f32 %v1612, %v1615
  %v1619 = vadd.f32 %v1613, %v1616
  %v1620 = vadd.f32 %v1614, %v1617
  %v1621 = vmul.f32 %v1559, -1.0714285
  %v1622 = vmul.f32 %v1560, -1.0714285
  %v1623 = vmul.f32 %v1561, -1.0714285
  %v1624 = vadd.f32 %v1618, %v1621
  %v1625 = vadd.f32 %v1619, %v1622
  %v1626 = vadd.f32 %v1620, %v1623
  %v1627 = vmul.f32 %v1562, 0.2857143
  %v1628 = vmul.f32 %v1563, 0.2857143
  %v1629 = vmul.f32 %v1564, 0.2857143
  %v1630 = vadd.f32 %v1624, %v1627
  %v1631 = vadd.f32 %v1625, %v1628
  %v1632 = vadd.f32 %v1626, %v1629
  %s1633 = scalar_lea.vmem %s1, 408
  %1634 = vst.msk [vmem:[%s1633] sm:$0xff] %vm40, %v1630
  %1635 = vst.msk [vmem:[%s1633 + $0x8] sm:$0xff] %vm40, %v1631
  %1636 = vst.msk [vmem:[%s1633 + $0x10] sm:$0xf] %vm1601, %v1632
  %v1637 = vmul.f32 %v1547, 0.2857143
  %v1638 = vmul.f32 %v1548, 0.2857143
  %v1639 = vmul.f32 %v1549, 0.2857143
  %v1640 = vadd.f32 %v1637, %v1568
  %v1641 = vadd.f32 %v1638, %v1569
  %v1642 = vadd.f32 %v1639, %v1570
  %v1643 = vmul.f32 %v1553, 1.1428572
  %v1644 = vmul.f32 %v1554, 1.1428572
  %v1645 = vmul.f32 %v1555, 1.1428572
  %v1646 = vadd.f32 %v1640, %v1643
  %v1647 = vadd.f32 %v1641, %v1644
  %v1648 = vadd.f32 %v1642, %v1645
  %v1649 = vmul.f32 %v1556, 1.7142857
  %v1650 = vmul.f32 %v1557, 1.7142857
  %v1651 = vmul.f32 %v1558, 1.7142857
  %v1652 = vadd.f32 %v1646, %v1649
  %v1653 = vadd.f32 %v1647, %v1650
  %v1654 = vadd.f32 %v1648, %v1651
  %v1655 = vmul.f32 %v1559, -1.4285715
  %v1656 = vmul.f32 %v1560, -1.4285715
  %v1657 = vmul.f32 %v1561, -1.4285715
  %v1658 = vadd.f32 %v1652, %v1655
  %v1659 = vadd.f32 %v1653, %v1656
  %v1660 = vadd.f32 %v1654, %v1657
  %v1661 = vmul.f32 %v1562, 0.35714287
  %v1662 = vmul.f32 %v1563, 0.35714287
  %v1663 = vmul.f32 %v1564, 0.35714287
  %v1664 = vadd.f32 %v1658, %v1661
  %v1665 = vadd.f32 %v1659, %v1662
  %v1666 = vadd.f32 %v1660, %v1663
  %s1667 = scalar_lea.vmem %s1, 432
  %1668 = vst.msk [vmem:[%s1667] sm:$0xff] %vm40, %v1664
  %1669 = vst.msk [vmem:[%s1667 + $0x8] sm:$0xff] %vm40, %v1665
  %1670 = vst.msk [vmem:[%s1667 + $0x10] sm:$0xf] %vm1601, %v1666
  %v1671 = vmul.f32 %v1547, 0.11904762
  %v1672 = vmul.f32 %v1548, 0.11904762
  %v1673 = vmul.f32 %v1549, 0.11904762
  %v1674 = vmul.f32 %v1550, -0.42857143
  %v1675 = vmul.f32 %v1551, -0.42857143
  %v1676 = vmul.f32 %v1552, -0.42857143
  %v1677 = vadd.f32 %v1671, %v1674
  %v1678 = vadd.f32 %v1672, %v1675
  %v1679 = vadd.f32 %v1673, %v1676
  %v1680 = vmul.f32 %v1553, 0.42857143
  %v1681 = vmul.f32 %v1554, 0.42857143
  %v1682 = vmul.f32 %v1555, 0.42857143
  %v1683 = vadd.f32 %v1677, %v1680
  %v1684 = vadd.f32 %v1678, %v1681
  %v1685 = vadd.f32 %v1679, %v1682
  %v1686 = vadd.f32 %v1683, %v1649
  %v1687 = vadd.f32 %v1684, %v1650
  %v1688 = vadd.f32 %v1685, %v1651
  %v1689 = vadd.f32 %v1686, %v1621
  %v1690 = vadd.f32 %v1687, %v1622
  %v1691 = vadd.f32 %v1688, %v1623
  %v1692 = vmul.f32 %v1562, 0.23809524
  %v1693 = vmul.f32 %v1563, 0.23809524
  %v1694 = vmul.f32 %v1564, 0.23809524
  %v1695 = vadd.f32 %v1689, %v1692
  %v1696 = vadd.f32 %v1690, %v1693
  %v1697 = vadd.f32 %v1691, %v1694
  %s1698 = scalar_lea.vmem %s1, 456
  %1699 = vst.msk [vmem:[%s1698] sm:$0xff] %vm40, %v1695
  %1700 = vst.msk [vmem:[%s1698 + $0x8] sm:$0xff] %vm40, %v1696
  %1701 = vst.msk [vmem:[%s1698 + $0x10] sm:$0xf] %vm1601, %v1697
  // Predicated region
  $region6: #{tpu_custom_call.1} parent=0 // pred_check
    _
  $region7: #{tpu_custom_call.1} parent=0 // pred_check_branch
    %1703 = sbr.rel (0) target = $region9
  $region8: #{tpu_custom_call.1} parent=0 // pred_region
    _
  $region9: #{tpu_custom_call.1} parent=0 // pred_fallthru
    _
  // Predicated region
  $region10: #{tpu_custom_call.1} parent=0 // pred_check
    _
  $region11: #{tpu_custom_call.1} parent=0 // pred_check_branch
    %1705 = sbr.rel (0) target = $region13
  $region12: #{tpu_custom_call.1} parent=0 // pred_region
    _
  $region13: #{tpu_custom_call.1} parent=0 // pred_fallthru
    _

</llo_original>
